<compile_context>
chip_gen: v7x
topology: tpu7x:2x2x1
jax: 0.10.0
libtpu: 0.0.40
codegen_flags: <defaults>
</compile_context>

<pallas_src>
import jax
import jax.numpy as jnp
from jax.experimental import pallas as pl
from jax.experimental.pallas import tpu as pltpu


def saliency_head_kernel(cls_ref, men_ref, ent_ref, sc_ref,
                         w1a_ref, w1b_ref, b1_ref,
                         w2_ref, b2_ref,
                         w3_ref, b3_ref,
                         out_ref, feats_ref):
    cls = cls_ref[...]          # (TN, D) f32
    men = men_ref[...]
    ent = ent_ref[...]
    _, d = cls.shape

    # Packed scalar scores: column 0 = md, column 1 = dis.
    md = sc_ref[:, 0:1]         # (TN, 1)
    dis = sc_ref[:, 1:2]        # (TN, 1)

    # Row-wise dot products (lane reduction on XLU), keepdims -> (TN, 1).
    dot_cm = jnp.sum(cls * men, axis=1, keepdims=True)
    dot_ce = jnp.sum(cls * ent, axis=1, keepdims=True)

    # ---- First Linear (folded weights, K = 6*D), two accumulating groups ----
    # Group 0: cast-only identity features -> bf16 scratch, then start the MXU
    # streaming them.
    feats_ref[:, 0 * d:1 * d] = cls.astype(jnp.bfloat16)
    feats_ref[:, 1 * d:2 * d] = men.astype(jnp.bfloat16)
    feats_ref[:, 2 * d:3 * d] = ent.astype(jnp.bfloat16)
    acc = jnp.dot(feats_ref[:, :3 * d], w1a_ref[:3 * d, :],
                  preferred_element_type=jnp.float32)

    # Group 1: product features, built while group 0 streams through the MXU,
    # then accumulated into the same f32 result.
    feats_ref[:, 3 * d:4 * d] = (men * ent).astype(jnp.bfloat16)
    feats_ref[:, 4 * d:5 * d] = (cls * men).astype(jnp.bfloat16)
    feats_ref[:, 5 * d:6 * d] = (cls * ent).astype(jnp.bfloat16)
    acc = acc + jnp.dot(feats_ref[:, 3 * d:], w1a_ref[3 * d:, :],
                        preferred_element_type=jnp.float32)

    # Fuse bias + the 4 rank-1 scalar-feature updates (VPU) into one expression.
    z1 = (acc + b1_ref[...]
          + md * w1b_ref[0:1, :]
          + dis * w1b_ref[1:2, :]
          + dot_cm * w1b_ref[2:3, :]
          + dot_ce * w1b_ref[3:4, :])
    h1 = jnp.maximum(z1, 0.0)                       # Linear + ReLU
    # Dropout(0.2) -> identity in eval mode.

    # ---- Second Linear + ReLU ----
    z2 = jnp.dot(h1.astype(jnp.bfloat16), w2_ref[...],
                 preferred_element_type=jnp.float32) + b2_ref[...]
    h2 = jnp.maximum(z2, 0.0)
    # Dropout(0.2) -> identity in eval mode.

    # Final (D -> 1) projection: VPU multiply + lane reduction instead of a
    # one-column MXU matmul. b3 is a scalar read from SMEM.
    logits = jnp.sum(h2 * w3_ref[...], axis=1, keepdims=True) + b3_ref[0, 0]
    out_ref[...] = logits.astype(out_ref.dtype)


def saliency_classification_head(cls_tokens_repr, mentions_repr, entities_repr,
                                 md_scores, dis_scores, params, *, tile_n=None):
    N, D = cls_tokens_repr.shape
    # TODO(synk): pad D (and the weights) to a multiple of 128 if ctxt_output_dim
    # is not lane-aligned; 768 (the module default) already is.
    assert D % 128 == 0, "hidden dim must be a multiple of 128 (lane width)"

    w1a, w1b, b1, w2, b2, w3_row, b3 = params
    assert w1a.shape == (6 * D, D), "w1a must be the folded (6*D, D) weight"

    # Tile selection: prefer the largest tile (<= 512 rows) that divides N AND
    # leaves an even multi-step grid, so the "parallel" grid axis can be sharded
    # across v7x's 2 TensorCores while large tiles amortize per-step overhead on
    # v5e/v6e (weights are resident, so bigger M is pure win there).
    if tile_n is None:
        cands = [t for t in (512, 384, 256, 192, 128, 96, 64, 48, 32, 24, 16, 8)
                 if N % t == 0 and t <= max(N // 2, 8)]
        even_grid = [t for t in cands if (N // t) % 2 == 0]
        if even_grid:
            tile_n = even_grid[0]
        elif cands:
            tile_n = cands[0]
        else:
            tile_n = N
    assert N % tile_n == 0 and (tile_n % 8 == 0 or tile_n == N)
    grid = (N // tile_n,)

    # Pack md/dis into one (N, 2) input: one narrow DMA per step instead of two.
    sc = jnp.concatenate([md_scores, dis_scores], axis=1)

    row_spec = pl.BlockSpec((tile_n, D), lambda i: (i, 0))
    sc_spec = pl.BlockSpec((tile_n, 2), lambda i: (i, 0))

    def weight_spec(shape):
        # Grid-invariant weights: single-buffer them (block never changes), which
        # halves their VMEM footprint vs. the default double-buffering.
        return pl.BlockSpec(shape, lambda i: (0, 0), pipeline_mode=pl.Buffered(1))

    smem_spec = pl.BlockSpec(memory_space=pltpu.MemorySpace.SMEM)

    # Explicit VMEM budget: single-buffered weights + double-buffered activation
    # tiles + bf16 feature scratch + 4 MiB headroom. No 32 MiB floor and no
    # 64 MiB cap (that's the whole per-TC VMEM on v7x): clamp to [16, 48] MiB.
    weight_bytes = (w1a.size * w1a.dtype.itemsize
                    + w2.size * w2.dtype.itemsize
                    + (w1b.size + b1.size + b2.size + w3_row.size) * 4)
    act_bytes = 2 * (3 * tile_n * D * 4 + tile_n * 2 * 4 + tile_n * 4)
    scratch_bytes = tile_n * 6 * D * 2
    vmem_limit = int(min(max(weight_bytes + act_bytes + scratch_bytes + (4 << 20),
                             16 << 20),
                         48 << 20))

    return pl.pallas_call(
        saliency_head_kernel,
        out_shape=jax.ShapeDtypeStruct((N, 1), jnp.float32),
        grid_spec=pltpu.PrefetchScalarGridSpec(
            num_scalar_prefetch=0,
            grid=grid,
            in_specs=[
                row_spec, row_spec, row_spec,         # cls, mentions, entities
                sc_spec,                              # packed (md, dis) scores
                weight_spec(w1a.shape), weight_spec(w1b.shape), weight_spec(b1.shape),
                weight_spec(w2.shape), weight_spec(b2.shape),
                weight_spec(w3_row.shape),
                smem_spec,                            # b3 scalar in SMEM
            ],
            out_specs=pl.BlockSpec((tile_n, 1), lambda i: (i, 0)),
            scratch_shapes=[pltpu.VMEM((tile_n, 6 * D), jnp.bfloat16)],
        ),
        compiler_params=pltpu.CompilerParams(
            dimension_semantics=("parallel",),
            vmem_limit_bytes=vmem_limit),
    )(cls_tokens_repr, mentions_repr, entities_repr, sc,
      w1a, w1b, b1, w2, b2, w3_row, b3)


def init_params(key, d):
    """Deterministic init matching nn.Linear shapes: W stored (in, out)."""
    f_in = 9 * d + 4
    ks = jax.random.split(key, 6)
    scale = 0.02
    w1 = scale * jax.random.normal(ks[0], (f_in, d), jnp.float32)
    b1 = scale * jax.random.normal(ks[1], (1, d), jnp.float32)
    w2 = scale * jax.random.normal(ks[2], (d, d), jnp.float32)
    b2 = scale * jax.random.normal(ks[3], (1, d), jnp.float32)
    w3 = scale * jax.random.normal(ks[4], (d, 1), jnp.float32)
    b3 = scale * jax.random.normal(ks[5], (1, 1), jnp.float32)

    # W1 rows split into 9 dense-feature (D, D) blocks + 4 scalar-feature rows.
    blk = [w1[i * d:(i + 1) * d, :] for i in range(9)]
    w1b = w1[9 * d:, :]                               # (4, D), f32 rank-1 updates

    # Algebraic fold (done in f32, cast ONCE to bf16): since
    #   feats @ W1 == cls@(W0+W5+W7) + men@(W1+W3-W5) + ent@(W2-W3-W7)
    #              + (men*ent)@W4 + (cls*men)@W6 + (cls*ent)@W8  (+ scalar rows),
    # the kernel only needs {cls, men, ent, men*ent, cls*men, cls*ent} and a
    # pre-combined (6*D, D) weight -> the first matmul's K drops from 9*D to 6*D.
    w1a_folded = jnp.concatenate([
        blk[0] + blk[5] + blk[7],    # cls
        blk[1] + blk[3] - blk[5],    # mentions
        blk[2] - blk[3] - blk[7],    # entities
        blk[4],                      # mentions * entities
        blk[6],                      # cls * mentions
        blk[8],                      # cls * entities
    ], axis=0).astype(jnp.bfloat16)

    w3_row = jnp.transpose(w3)                        # (1, D) row for lane reduce
    kernel_params = (w1a_folded, w1b, b1, w2.astype(jnp.bfloat16), b2, w3_row, b3)
    full_params = (w1, b1, w2, b2, w3, b3)
    return kernel_params, full_params


def reference_forward(cls_t, men, ent, md, dis, full_params):
    """Pure-JAX f32 reference reproducing the PyTorch forward (eval mode)."""
    w1, b1, w2, b2, w3, b3 = full_params
    dot_cm = jnp.sum(cls_t * men, axis=1, keepdims=True)
    dot_ce = jnp.sum(cls_t * ent, axis=1, keepdims=True)
    feats = jnp.concatenate(
        [cls_t, men, ent, men - ent, men * ent, cls_t - men, cls_t * men,
         cls_t - ent, cls_t * ent, md, dis, dot_cm, dot_ce], axis=1)
    h1 = jnp.maximum(feats @ w1 + b1, 0.0)
    h2 = jnp.maximum(h1 @ w2 + b2, 0.0)
    return h2 @ w3 + b3


if __name__ == "__main__":
    # Small synthetic shapes: batch N=256 rows, ctxt_output_dim D=128 (lane-aligned).
    N, D = 256, 128
    key = jax.random.PRNGKey(0)
    k_cls, k_men, k_ent, k_md, k_dis, k_par = jax.random.split(key, 6)

    cls_t = jax.random.normal(k_cls, (N, D), jnp.float32)
    men = jax.random.normal(k_men, (N, D), jnp.float32)
    ent = jax.random.normal(k_ent, (N, D), jnp.float32)
    md = jax.random.uniform(k_md, (N, 1), jnp.float32)
    dis = jax.random.uniform(k_dis, (N, 1), jnp.float32)

    params, full_params = init_params(k_par, D)

    out = saliency_classification_head(cls_t, men, ent, md, dis, params)
    out = jax.block_until_ready(out)

    ref = reference_forward(cls_t, men, ent, md, dis, full_params)
    assert out.shape == (N, 1)
    max_err = float(jnp.max(jnp.abs(out - ref)))
    # bf16 MXU operands (f32 accumulation) -> slightly looser tolerance than pure f32.
    assert jnp.allclose(out, ref, atol=1e-2, rtol=1e-2), ("max_err", max_err)
    print("KERNEL_OK")
</pallas_src>

<mosaic_0001>
module attributes {stable_mosaic.version = 11 : i64} {
  func.func @saliency_head_kernel(%arg0: i32, %arg1: memref<128x128xf32, #tpu.memory_space<vmem>>, %arg2: memref<128x128xf32, #tpu.memory_space<vmem>>, %arg3: memref<128x128xf32, #tpu.memory_space<vmem>>, %arg4: memref<128x2xf32, #tpu.memory_space<vmem>>, %arg5: memref<768x128xbf16, #tpu.memory_space<vmem>>, %arg6: memref<4x128xf32, #tpu.memory_space<vmem>>, %arg7: memref<1x128xf32, #tpu.memory_space<vmem>>, %arg8: memref<128x128xbf16, #tpu.memory_space<vmem>>, %arg9: memref<1x128xf32, #tpu.memory_space<vmem>>, %arg10: memref<1x128xf32, #tpu.memory_space<vmem>>, %arg11: memref<1x1xf32, #tpu.memory_space<smem>>, %arg12: memref<128x1xf32, #tpu.memory_space<vmem>>, %arg13: memref<128x768xbf16, #tpu.memory_space<vmem>>) attributes {dimension_semantics = [#tpu.dimension_semantics<parallel>], iteration_bounds = array<i64: 2>, scalar_prefetch = 0 : i64, scratch_operands = 1 : i64, tpu.core_type = #tpu.core_type<tc>, window_params = [{transform_indices = @transform_0, window_bounds = array<i64: 128, 128>}, {transform_indices = @transform_1, window_bounds = array<i64: 128, 128>}, {transform_indices = @transform_2, window_bounds = array<i64: 128, 128>}, {transform_indices = @transform_3, window_bounds = array<i64: 128, 2>}, {pipeline_mode = #tpu.pipeline_mode<synchronous>, transform_indices = @transform_4, window_bounds = array<i64: 768, 128>}, {pipeline_mode = #tpu.pipeline_mode<synchronous>, transform_indices = @transform_5, window_bounds = array<i64: 4, 128>}, {pipeline_mode = #tpu.pipeline_mode<synchronous>, transform_indices = @transform_6, window_bounds = array<i64: 1, 128>}, {pipeline_mode = #tpu.pipeline_mode<synchronous>, transform_indices = @transform_7, window_bounds = array<i64: 128, 128>}, {pipeline_mode = #tpu.pipeline_mode<synchronous>, transform_indices = @transform_8, window_bounds = array<i64: 1, 128>}, {pipeline_mode = #tpu.pipeline_mode<synchronous>, transform_indices = @transform_9, window_bounds = array<i64: 1, 128>}, {transform_indices = @transform_10, window_bounds = array<i64: 1, 1>}, {transform_indices = @transform_11, window_bounds = array<i64: 128, 1>}]} {
    %c0 = arith.constant 0 : index
    %c0_0 = arith.constant 0 : index
    %0 = vector.load %arg1[%c0, %c0_0] : memref<128x128xf32, #tpu.memory_space<vmem>>, vector<128x128xf32>
    %c0_1 = arith.constant 0 : index
    %c0_2 = arith.constant 0 : index
    %1 = vector.load %arg2[%c0_1, %c0_2] : memref<128x128xf32, #tpu.memory_space<vmem>>, vector<128x128xf32>
    %c0_3 = arith.constant 0 : index
    %c0_4 = arith.constant 0 : index
    %2 = vector.load %arg3[%c0_3, %c0_4] : memref<128x128xf32, #tpu.memory_space<vmem>>, vector<128x128xf32>
    %c0_5 = arith.constant 0 : index
    %c0_6 = arith.constant 0 : index
    %3 = vector.load %arg4[%c0_5, %c0_6] : memref<128x2xf32, #tpu.memory_space<vmem>>, vector<128x1xf32>
    %c0_7 = arith.constant 0 : index
    %c1 = arith.constant 1 : index
    %4 = vector.load %arg4[%c0_7, %c1] : memref<128x2xf32, #tpu.memory_space<vmem>>, vector<128x1xf32>
    %5 = arith.mulf %0, %1 : vector<128x128xf32>
    %cst = arith.constant dense<0.000000e+00> : vector<128xf32>
    %6 = vector.multi_reduction <add>, %5, %cst [1] : vector<128x128xf32> to vector<128xf32>
    %7 = vector.shape_cast %6 : vector<128xf32> to vector<128x1xf32>
    %8 = arith.mulf %0, %2 : vector<128x128xf32>
    %cst_8 = arith.constant dense<0.000000e+00> : vector<128xf32>
    %9 = vector.multi_reduction <add>, %8, %cst_8 [1] : vector<128x128xf32> to vector<128xf32>
    %10 = vector.shape_cast %9 : vector<128xf32> to vector<128x1xf32>
    %11 = arith.truncf %0 : vector<128x128xf32> to vector<128x128xbf16>
    %c0_9 = arith.constant 0 : index
    %c0_10 = arith.constant 0 : index
    %12 = vector.load %arg13[%c0_9, %c0_10] : memref<128x768xbf16, #tpu.memory_space<vmem>>, vector<128x128xbf16>
    tpu.vector_store %arg13[%c0_9, %c0_10], %11 {strides = array<i32>} : memref<128x768xbf16, #tpu.memory_space<vmem>>, vector<128x128xbf16>,
    %13 = arith.truncf %1 : vector<128x128xf32> to vector<128x128xbf16>
    %c0_11 = arith.constant 0 : index
    %c128 = arith.constant 128 : index
    %14 = vector.load %arg13[%c0_11, %c128] : memref<128x768xbf16, #tpu.memory_space<vmem>>, vector<128x128xbf16>
    tpu.vector_store %arg13[%c0_11, %c128], %13 {strides = array<i32>} : memref<128x768xbf16, #tpu.memory_space<vmem>>, vector<128x128xbf16>,
    %15 = arith.truncf %2 : vector<128x128xf32> to vector<128x128xbf16>
    %c0_12 = arith.constant 0 : index
    %c256 = arith.constant 256 : index
    %16 = vector.load %arg13[%c0_12, %c256] : memref<128x768xbf16, #tpu.memory_space<vmem>>, vector<128x128xbf16>
    tpu.vector_store %arg13[%c0_12, %c256], %15 {strides = array<i32>} : memref<128x768xbf16, #tpu.memory_space<vmem>>, vector<128x128xbf16>,
    %c0_13 = arith.constant 0 : index
    %c0_14 = arith.constant 0 : index
    %17 = vector.load %arg13[%c0_13, %c0_14] : memref<128x768xbf16, #tpu.memory_space<vmem>>, vector<128x384xbf16>
    %c0_15 = arith.constant 0 : index
    %c0_16 = arith.constant 0 : index
    %18 = vector.load %arg5[%c0_15, %c0_16] : memref<768x128xbf16, #tpu.memory_space<vmem>>, vector<384x128xbf16>
    %cst_17 = arith.constant dense<0.000000e+00> : vector<128x128xf32>
    %19 = tpu.matmul %17, %18, %cst_17 {dimension_numbers = #tpu.dot_dimension_numbers<[1], [0], [0], [1], [0, 0, 1, 1], [], []>} : vector<128x384xbf16>, vector<384x128xbf16>, vector<128x128xf32> -> vector<128x128xf32>
    %20 = arith.mulf %1, %2 : vector<128x128xf32>
    %21 = arith.truncf %20 : vector<128x128xf32> to vector<128x128xbf16>
    %c0_18 = arith.constant 0 : index
    %c384 = arith.constant 384 : index
    %22 = vector.load %arg13[%c0_18, %c384] : memref<128x768xbf16, #tpu.memory_space<vmem>>, vector<128x128xbf16>
    tpu.vector_store %arg13[%c0_18, %c384], %21 {strides = array<i32>} : memref<128x768xbf16, #tpu.memory_space<vmem>>, vector<128x128xbf16>,
    %23 = arith.mulf %0, %1 : vector<128x128xf32>
    %24 = arith.truncf %23 : vector<128x128xf32> to vector<128x128xbf16>
    %c0_19 = arith.constant 0 : index
    %c512 = arith.constant 512 : index
    %25 = vector.load %arg13[%c0_19, %c512] : memref<128x768xbf16, #tpu.memory_space<vmem>>, vector<128x128xbf16>
    tpu.vector_store %arg13[%c0_19, %c512], %24 {strides = array<i32>} : memref<128x768xbf16, #tpu.memory_space<vmem>>, vector<128x128xbf16>,
    %26 = arith.mulf %0, %2 : vector<128x128xf32>
    %27 = arith.truncf %26 : vector<128x128xf32> to vector<128x128xbf16>
    %c0_20 = arith.constant 0 : index
    %c640 = arith.constant 640 : index
    %28 = vector.load %arg13[%c0_20, %c640] : memref<128x768xbf16, #tpu.memory_space<vmem>>, vector<128x128xbf16>
    tpu.vector_store %arg13[%c0_20, %c640], %27 {strides = array<i32>} : memref<128x768xbf16, #tpu.memory_space<vmem>>, vector<128x128xbf16>,
    %c0_21 = arith.constant 0 : index
    %c384_22 = arith.constant 384 : index
    %29 = vector.load %arg13[%c0_21, %c384_22] : memref<128x768xbf16, #tpu.memory_space<vmem>>, vector<128x384xbf16>
    %c384_23 = arith.constant 384 : index
    %c0_24 = arith.constant 0 : index
    %30 = vector.load %arg5[%c384_23, %c0_24] : memref<768x128xbf16, #tpu.memory_space<vmem>>, vector<384x128xbf16>
    %cst_25 = arith.constant dense<0.000000e+00> : vector<128x128xf32>
    %31 = tpu.matmul %29, %30, %cst_25 {dimension_numbers = #tpu.dot_dimension_numbers<[1], [0], [0], [1], [0, 0, 1, 1], [], []>} : vector<128x384xbf16>, vector<384x128xbf16>, vector<128x128xf32> -> vector<128x128xf32>
    %32 = arith.addf %19, %31 : vector<128x128xf32>
    %c0_26 = arith.constant 0 : index
    %c0_27 = arith.constant 0 : index
    %33 = vector.load %arg7[%c0_26, %c0_27] : memref<1x128xf32, #tpu.memory_space<vmem>>, vector<1x128xf32>
    %34 = vector.broadcast %33 : vector<1x128xf32> to vector<128x128xf32>
    %35 = arith.addf %32, %34 : vector<128x128xf32>
    %c0_28 = arith.constant 0 : index
    %c0_29 = arith.constant 0 : index
    %36 = vector.load %arg6[%c0_28, %c0_29] : memref<4x128xf32, #tpu.memory_space<vmem>>, vector<1x128xf32>
    %37 = vector.broadcast %3 : vector<128x1xf32> to vector<128x128xf32>
    %38 = vector.broadcast %36 : vector<1x128xf32> to vector<128x128xf32>
    %39 = arith.mulf %37, %38 : vector<128x128xf32>
    %40 = arith.addf %35, %39 : vector<128x128xf32>
    %c1_30 = arith.constant 1 : index
    %c0_31 = arith.constant 0 : index
    %41 = vector.load %arg6[%c1_30, %c0_31] : memref<4x128xf32, #tpu.memory_space<vmem>>, vector<1x128xf32>
    %42 = vector.broadcast %4 : vector<128x1xf32> to vector<128x128xf32>
    %43 = vector.broadcast %41 : vector<1x128xf32> to vector<128x128xf32>
    %44 = arith.mulf %42, %43 : vector<128x128xf32>
    %45 = arith.addf %40, %44 : vector<128x128xf32>
    %c2 = arith.constant 2 : index
    %c0_32 = arith.constant 0 : index
    %46 = vector.load %arg6[%c2, %c0_32] : memref<4x128xf32, #tpu.memory_space<vmem>>, vector<1x128xf32>
    %47 = vector.broadcast %7 : vector<128x1xf32> to vector<128x128xf32>
    %48 = vector.broadcast %46 : vector<1x128xf32> to vector<128x128xf32>
    %49 = arith.mulf %47, %48 : vector<128x128xf32>
    %50 = arith.addf %45, %49 : vector<128x128xf32>
    %c3 = arith.constant 3 : index
    %c0_33 = arith.constant 0 : index
    %51 = vector.load %arg6[%c3, %c0_33] : memref<4x128xf32, #tpu.memory_space<vmem>>, vector<1x128xf32>
    %52 = vector.broadcast %10 : vector<128x1xf32> to vector<128x128xf32>
    %53 = vector.broadcast %51 : vector<1x128xf32> to vector<128x128xf32>
    %54 = arith.mulf %52, %53 : vector<128x128xf32>
    %55 = arith.addf %50, %54 : vector<128x128xf32>
    %cst_34 = arith.constant 0.000000e+00 : f32
    %56 = vector.broadcast %cst_34 : f32 to vector<128x128xf32>
    %57 = arith.maximumf %55, %56 : vector<128x128xf32>
    %58 = arith.truncf %57 : vector<128x128xf32> to vector<128x128xbf16>
    %c0_35 = arith.constant 0 : index
    %c0_36 = arith.constant 0 : index
    %59 = vector.load %arg8[%c0_35, %c0_36] : memref<128x128xbf16, #tpu.memory_space<vmem>>, vector<128x128xbf16>
    %cst_37 = arith.constant dense<0.000000e+00> : vector<128x128xf32>
    %60 = tpu.matmul %58, %59, %cst_37 {dimension_numbers = #tpu.dot_dimension_numbers<[1], [0], [0], [1], [0, 0, 1, 1], [], []>} : vector<128x128xbf16>, vector<128x128xbf16>, vector<128x128xf32> -> vector<128x128xf32>
    %c0_38 = arith.constant 0 : index
    %c0_39 = arith.constant 0 : index
    %61 = vector.load %arg9[%c0_38, %c0_39] : memref<1x128xf32, #tpu.memory_space<vmem>>, vector<1x128xf32>
    %62 = vector.broadcast %61 : vector<1x128xf32> to vector<128x128xf32>
    %63 = arith.addf %60, %62 : vector<128x128xf32>
    %cst_40 = arith.constant 0.000000e+00 : f32
    %64 = vector.broadcast %cst_40 : f32 to vector<128x128xf32>
    %65 = arith.maximumf %63, %64 : vector<128x128xf32>
    %c0_41 = arith.constant 0 : index
    %c0_42 = arith.constant 0 : index
    %66 = vector.load %arg10[%c0_41, %c0_42] : memref<1x128xf32, #tpu.memory_space<vmem>>, vector<1x128xf32>
    %67 = vector.broadcast %66 : vector<1x128xf32> to vector<128x128xf32>
    %68 = arith.mulf %65, %67 : vector<128x128xf32>
    %cst_43 = arith.constant dense<0.000000e+00> : vector<128xf32>
    %69 = vector.multi_reduction <add>, %68, %cst_43 [1] : vector<128x128xf32> to vector<128xf32>
    %70 = vector.shape_cast %69 : vector<128xf32> to vector<128x1xf32>
    %c0_44 = arith.constant 0 : index
    %c0_45 = arith.constant 0 : index
    %71 = memref.load %arg11[%c0_44, %c0_45] : memref<1x1xf32, #tpu.memory_space<smem>>
    %72 = vector.broadcast %71 : f32 to vector<128x1xf32>
    %73 = arith.addf %70, %72 : vector<128x1xf32>
    %c0_46 = arith.constant 0 : index
    %c0_47 = arith.constant 0 : index
    %74 = vector.load %arg12[%c0_46, %c0_47] : memref<128x1xf32, #tpu.memory_space<vmem>>, vector<128x1xf32>
    tpu.vector_store %arg12[%c0_46, %c0_47], %73 {strides = array<i32>} : memref<128x1xf32, #tpu.memory_space<vmem>>, vector<128x1xf32>,
    return
  }
  func.func @transform_0(%arg0: i32) -> (i32, i32) {
    %c0_i32 = arith.constant 0 : i32
    %c0_i32_0 = arith.constant 0 : i32
    return %arg0, %c0_i32 : i32, i32
  }
  func.func @transform_1(%arg0: i32) -> (i32, i32) {
    %c0_i32 = arith.constant 0 : i32
    %c0_i32_0 = arith.constant 0 : i32
    return %arg0, %c0_i32 : i32, i32
  }
  func.func @transform_2(%arg0: i32) -> (i32, i32) {
    %c0_i32 = arith.constant 0 : i32
    %c0_i32_0 = arith.constant 0 : i32
    return %arg0, %c0_i32 : i32, i32
  }
  func.func @transform_3(%arg0: i32) -> (i32, i32) {
    %c0_i32 = arith.constant 0 : i32
    %c0_i32_0 = arith.constant 0 : i32
    return %arg0, %c0_i32 : i32, i32
  }
  func.func @transform_4(%arg0: i32) -> (i32, i32) {
    %c0_i32 = arith.constant 0 : i32
    %c0_i32_0 = arith.constant 0 : i32
    %c0_i32_1 = arith.constant 0 : i32
    return %c0_i32, %c0_i32_0 : i32, i32
  }
  func.func @transform_5(%arg0: i32) -> (i32, i32) {
    %c0_i32 = arith.constant 0 : i32
    %c0_i32_0 = arith.constant 0 : i32
    %c0_i32_1 = arith.constant 0 : i32
    return %c0_i32, %c0_i32_0 : i32, i32
  }
  func.func @transform_6(%arg0: i32) -> (i32, i32) {
    %c0_i32 = arith.constant 0 : i32
    %c0_i32_0 = arith.constant 0 : i32
    %c0_i32_1 = arith.constant 0 : i32
    return %c0_i32, %c0_i32_0 : i32, i32
  }
  func.func @transform_7(%arg0: i32) -> (i32, i32) {
    %c0_i32 = arith.constant 0 : i32
    %c0_i32_0 = arith.constant 0 : i32
    %c0_i32_1 = arith.constant 0 : i32
    return %c0_i32, %c0_i32_0 : i32, i32
  }
  func.func @transform_8(%arg0: i32) -> (i32, i32) {
    %c0_i32 = arith.constant 0 : i32
    %c0_i32_0 = arith.constant 0 : i32
    %c0_i32_1 = arith.constant 0 : i32
    return %c0_i32, %c0_i32_0 : i32, i32
  }
  func.func @transform_9(%arg0: i32) -> (i32, i32) {
    %c0_i32 = arith.constant 0 : i32
    %c0_i32_0 = arith.constant 0 : i32
    %c0_i32_1 = arith.constant 0 : i32
    return %c0_i32, %c0_i32_0 : i32, i32
  }
  func.func @transform_10(%arg0: i32) -> (i32, i32) {
    %c0_i32 = arith.constant 0 : i32
    %c0_i32_0 = arith.constant 0 : i32
    %c0_i32_1 = arith.constant 0 : i32
    return %c0_i32, %c0_i32_0 : i32, i32
  }
  func.func @transform_11(%arg0: i32) -> (i32, i32) {
    %c0_i32 = arith.constant 0 : i32
    %c0_i32_0 = arith.constant 0 : i32
    return %arg0, %c0_i32 : i32, i32
  }
}

</mosaic_0001>

<llo_original>
// kernel: tpu_custom_call.1
$region0: #{tpu_custom_call.1}
  #allocation0 [shape = 'u32[]', space=smem, size = 0x4, offset = 0x4, fixed_abs, tag = 'smem constant byte address 0x4 - core index']
  #allocation1 [shape = 'u32[144,128]{1,0:T(1,128)}', space=vmem, size = 0x12000, scoped, tag = 'internal scratch']
  #allocation2 [shape = 'bf16[128,768]{1,0:T(16,128)(2,1)}', space=vmem, size = 0x30000, scoped, tag = 'scratch operand']
  #allocation3 [shape = 'f32[1,1]{1,0:T(1,128)S(6)}', space=smem, size = 0x200, scoped, tag = 'scoped memory for tpu_custom_call.1']
  %s0 = inlined_call_operand.vmem [shape: f32[256,128], index: 0, kind: input, shape index: {}]
  %s1 = inlined_call_operand.hbm [shape: f32[256,128], index: 1, kind: input, shape index: {}]
  %s2 = inlined_call_operand.hbm [shape: f32[256,128], index: 2, kind: input, shape index: {}]
  %s3 = inlined_call_operand.vmem [shape: f32[256,2], index: 3, kind: input, shape index: {}]
  %s4 = inlined_call_operand.hbm [shape: bf16[768,128], index: 4, kind: input, shape index: {}]
  %s5 = inlined_call_operand.vmem [shape: f32[4,128], index: 5, kind: input, shape index: {}]
  %s6 = inlined_call_operand.vmem [shape: f32[1,128], index: 6, kind: input, shape index: {}]
  %s7 = inlined_call_operand.hbm [shape: bf16[128,128], index: 7, kind: input, shape index: {}]
  %s8 = inlined_call_operand.vmem [shape: f32[1,128], index: 8, kind: input, shape index: {}]
  %s9 = inlined_call_operand.vmem [shape: f32[1,128], index: 9, kind: input, shape index: {}]
  %s10 = inlined_call_operand.<no memory space> [shape: f32[1,1], index: 10, kind: input, shape index: {}]
  %s11 = inlined_call_operand.vmem [shape: f32[256,1], index: 11, kind: output, shape index: {}]
  %s12 = sld [smem:[#allocation0]]
  $region93: #{tpu_custom_call.1} parent=0
    _
  %s14 = ssub.s32 1, %s12
  %s15 = scalar_select 0, %s14, %s12
  %16 = sst [smem:[#allocation3]] %s10
  $region1: #{tpu_custom_call.1} parent=0
    #allocation4 [shape = 'u8[131072]{0}', space=vmem, size = 0x20000, scoped, tag = 'input window, operand 1']
    #allocation5 [shape = 's32[2]{0}', space=sflag, size = 0x8, scoped, tag = 'scoped memory for tpu_custom_call.1']
    #allocation6 [shape = 'u8[131072]{0}', space=vmem, size = 0x20000, scoped, tag = 'input window, operand 2']
    #allocation7 [shape = 's32[2]{0}', space=sflag, size = 0x8, scoped, tag = 'scoped memory for tpu_custom_call.1']
    #allocation8 [shape = 'u8[196608]{0}', space=vmem, size = 0x30000, scoped, tag = 'input window, operand 4, single buffered']
    #allocation9 [shape = 'u8[32768]{0}', space=vmem, size = 0x8000, scoped, tag = 'input window, operand 7, single buffered']
    #allocation10 [shape = 's32[1]{0}', space=sflag, size = 0x4, scoped, tag = 'scoped memory for tpu_custom_call.1']
    %17 = vsyncpa [#allocation5], 0
    %s18 = scalar_lea.sflag [#allocation5], 1
    %19 = vsyncpa %s18, 0
    %20 = vsyncpa [#allocation7], 0
    %s21 = scalar_lea.sflag [#allocation7], 1
    %22 = vsyncpa %s21, 0
    %23 = vsyncpa [#allocation10], 0
    loop: start=0, step=1, limit=4
    $region2: #{tpu_custom_call.1} parent=1 // loop_pre_header
      _
    $region3: #{tpu_custom_call.1} parent=1 // loop_header
      %s25 = sphi 0, %s29
      %p26 = scmp.ge.s32.totalorder %s25, 4
      %s35 = sphi 0, %s37
      %s38 = sphi 0, %s35
      %s39 = sphi 0, %s38
      %s55 = sphi 0, %s39
      %s61 = sphi 0, %s63
      %s64 = sphi 0, %s61
      %s65 = sphi 0, %s64
      %s81 = sphi 0, %s65
      %s87 = sphi 0, %s89
      %s90 = sphi 0, %s87
      %s91 = sphi 0, %s90
      %s107 = sphi 0, %s91
      %s113 = sphi 0, %s115
      %s116 = sphi 0, %s113
      %s117 = sphi 0, %s116
      %s133 = sphi 0, %s117
      %s137 = sphi 0, %s137
      %s139 = sphi 0, %s137
      %s140 = sphi 0, %s139
      %s154 = sphi 0, %s140
      %s158 = sphi 0, %s158
      %s160 = sphi 0, %s158
      %s161 = sphi 0, %s160
      %s175 = sphi 0, %s161
      %s179 = sphi 0, %s179
      %s181 = sphi 0, %s179
      %s182 = sphi 0, %s181
      %s196 = sphi 0, %s182
      %s200 = sphi 0, %s200
      %s202 = sphi 0, %s200
      %s203 = sphi 0, %s202
      %s217 = sphi 0, %s203
      %s221 = sphi 0, %s221
      %s223 = sphi 0, %s221
      %s224 = sphi 0, %s223
      %s238 = sphi 0, %s224
      %s242 = sphi 0, %s242
      %s244 = sphi 0, %s242
      %s245 = sphi 0, %s244
      %s259 = sphi 0, %s245
      %s263 = sphi 0, %s263
      %s265 = sphi 0, %s263
      %s266 = sphi 0, %s265
      %s280 = sphi 0, %s266
      %s286 = sphi 0, %s288
      %s289 = sphi 0, %s286
      %s290 = sphi 0, %s289
      %s306 = sphi 0, %s290
    $region4: #{tpu_custom_call.1} parent=1 // loop_header_branch
      %28 = sbr.rel (%p26) target = $region8
    $region5: #{tpu_custom_call.1} parent=1 // loop_body
      %s30 = ssub.s32 %s25, 1
      %s31 = ssub.s32 %s25, 2
      %s32 = sadd.s32 %s25, 1
      %s33 = ssub.s32 %s25, %s32
      %p34 = scmp.eq.s32.totalorder %s33, 0
      %s36 = sadd.s32 %s35, 1
      %s37 = scalar_select %p34, %s35, %s36
      %p40 = pneg %p34
      %p41 = scmp.eq.s32.totalorder %s25, 1
      %p42 = por %p40, %p41
      %p43 = scmp.ne.s32.totalorder %s35, %s38
      %p44 = scmp.eq.s32.totalorder %s25, 0
      %p45 = por %p43, %p44
      %p46 = scmp.ne.s32.totalorder %s35, %s38
      %p47 = scmp.eq.s32.totalorder %s30, 1
      %p48 = por %p46, %p47
      %p49 = scmp.ne.s32.totalorder %s38, %s39
      %p50 = scmp.eq.s32.totalorder %s30, 0
      %p51 = por %p49, %p50
      %p52 = scmp.ne.s32.totalorder %s38, %s39
      %p53 = scmp.eq.s32.totalorder %s31, 1
      %p54 = por %p52, %p53
      %p56 = scmp.ne.s32.totalorder %s39, %s55
      %p57 = scmp.eq.s32.totalorder %s31, 0
      %p58 = por %p56, %p57
      %s59 = ssub.s32 %s25, %s32
      %p60 = scmp.eq.s32.totalorder %s59, 0
      %s62 = sadd.s32 %s61, 1
      %s63 = scalar_select %p60, %s61, %s62
      %p66 = pneg %p60
      %p67 = scmp.eq.s32.totalorder %s25, 1
      %p68 = por %p66, %p67
      %p69 = scmp.ne.s32.totalorder %s61, %s64
      %p70 = scmp.eq.s32.totalorder %s25, 0
      %p71 = por %p69, %p70
      %p72 = scmp.ne.s32.totalorder %s61, %s64
      %p73 = scmp.eq.s32.totalorder %s30, 1
      %p74 = por %p72, %p73
      %p75 = scmp.ne.s32.totalorder %s64, %s65
      %p76 = scmp.eq.s32.totalorder %s30, 0
      %p77 = por %p75, %p76
      %p78 = scmp.ne.s32.totalorder %s64, %s65
      %p79 = scmp.eq.s32.totalorder %s31, 1
      %p80 = por %p78, %p79
      %p82 = scmp.ne.s32.totalorder %s65, %s81
      %p83 = scmp.eq.s32.totalorder %s31, 0
      %p84 = por %p82, %p83
      %s85 = ssub.s32 %s25, %s32
      %p86 = scmp.eq.s32.totalorder %s85, 0
      %s88 = sadd.s32 %s87, 1
      %s89 = scalar_select %p86, %s87, %s88
      %p92 = pneg %p86
      %p93 = scmp.eq.s32.totalorder %s25, 1
      %p94 = por %p92, %p93
      %p95 = scmp.ne.s32.totalorder %s87, %s90
      %p96 = scmp.eq.s32.totalorder %s25, 0
      %p97 = por %p95, %p96
      %p98 = scmp.ne.s32.totalorder %s87, %s90
      %p99 = scmp.eq.s32.totalorder %s30, 1
      %p100 = por %p98, %p99
      %p101 = scmp.ne.s32.totalorder %s90, %s91
      %p102 = scmp.eq.s32.totalorder %s30, 0
      %p103 = por %p101, %p102
      %p104 = scmp.ne.s32.totalorder %s90, %s91
      %p105 = scmp.eq.s32.totalorder %s31, 1
      %p106 = por %p104, %p105
      %p108 = scmp.ne.s32.totalorder %s91, %s107
      %p109 = scmp.eq.s32.totalorder %s31, 0
      %p110 = por %p108, %p109
      %s111 = ssub.s32 %s25, %s32
      %p112 = scmp.eq.s32.totalorder %s111, 0
      %s114 = sadd.s32 %s113, 1
      %s115 = scalar_select %p112, %s113, %s114
      %p118 = pneg %p112
      %p119 = scmp.eq.s32.totalorder %s25, 1
      %p120 = por %p118, %p119
      %p121 = scmp.ne.s32.totalorder %s113, %s116
      %p122 = scmp.eq.s32.totalorder %s25, 0
      %p123 = por %p121, %p122
      %p124 = scmp.ne.s32.totalorder %s113, %s116
      %p125 = scmp.eq.s32.totalorder %s30, 1
      %p126 = por %p124, %p125
      %p127 = scmp.ne.s32.totalorder %s116, %s117
      %p128 = scmp.eq.s32.totalorder %s30, 0
      %p129 = por %p127, %p128
      %p130 = scmp.ne.s32.totalorder %s116, %s117
      %p131 = scmp.eq.s32.totalorder %s31, 1
      %p132 = por %p130, %p131
      %p134 = scmp.ne.s32.totalorder %s117, %s133
      %p135 = scmp.eq.s32.totalorder %s31, 0
      %p136 = por %p134, %p135
      %s138 = sadd.s32 %s137, 1
      %p141 = scmp.eq.s32.totalorder %s25, 1
      %p142 = scmp.ne.s32.totalorder %s137, %s139
      %p143 = scmp.eq.s32.totalorder %s25, 0
      %p144 = por %p142, %p143
      %p145 = scmp.ne.s32.totalorder %s137, %s139
      %p146 = scmp.eq.s32.totalorder %s30, 1
      %p147 = por %p145, %p146
      %p148 = scmp.ne.s32.totalorder %s139, %s140
      %p149 = scmp.eq.s32.totalorder %s30, 0
      %p150 = por %p148, %p149
      %p151 = scmp.ne.s32.totalorder %s139, %s140
      %p152 = scmp.eq.s32.totalorder %s31, 1
      %p153 = por %p151, %p152
      %p155 = scmp.ne.s32.totalorder %s140, %s154
      %p156 = scmp.eq.s32.totalorder %s31, 0
      %p157 = por %p155, %p156
      %s159 = sadd.s32 %s158, 1
      %p162 = scmp.eq.s32.totalorder %s25, 1
      %p163 = scmp.ne.s32.totalorder %s158, %s160
      %p164 = scmp.eq.s32.totalorder %s25, 0
      %p165 = por %p163, %p164
      %p166 = scmp.ne.s32.totalorder %s158, %s160
      %p167 = scmp.eq.s32.totalorder %s30, 1
      %p168 = por %p166, %p167
      %p169 = scmp.ne.s32.totalorder %s160, %s161
      %p170 = scmp.eq.s32.totalorder %s30, 0
      %p171 = por %p169, %p170
      %p172 = scmp.ne.s32.totalorder %s160, %s161
      %p173 = scmp.eq.s32.totalorder %s31, 1
      %p174 = por %p172, %p173
      %p176 = scmp.ne.s32.totalorder %s161, %s175
      %p177 = scmp.eq.s32.totalorder %s31, 0
      %p178 = por %p176, %p177
      %s180 = sadd.s32 %s179, 1
      %p183 = scmp.eq.s32.totalorder %s25, 1
      %p184 = scmp.ne.s32.totalorder %s179, %s181
      %p185 = scmp.eq.s32.totalorder %s25, 0
      %p186 = por %p184, %p185
      %p187 = scmp.ne.s32.totalorder %s179, %s181
      %p188 = scmp.eq.s32.totalorder %s30, 1
      %p189 = por %p187, %p188
      %p190 = scmp.ne.s32.totalorder %s181, %s182
      %p191 = scmp.eq.s32.totalorder %s30, 0
      %p192 = por %p190, %p191
      %p193 = scmp.ne.s32.totalorder %s181, %s182
      %p194 = scmp.eq.s32.totalorder %s31, 1
      %p195 = por %p193, %p194
      %p197 = scmp.ne.s32.totalorder %s182, %s196
      %p198 = scmp.eq.s32.totalorder %s31, 0
      %p199 = por %p197, %p198
      %s201 = sadd.s32 %s200, 1
      %p204 = scmp.eq.s32.totalorder %s25, 1
      %p205 = scmp.ne.s32.totalorder %s200, %s202
      %p206 = scmp.eq.s32.totalorder %s25, 0
      %p207 = por %p205, %p206
      %p208 = scmp.ne.s32.totalorder %s200, %s202
      %p209 = scmp.eq.s32.totalorder %s30, 1
      %p210 = por %p208, %p209
      %p211 = scmp.ne.s32.totalorder %s202, %s203
      %p212 = scmp.eq.s32.totalorder %s30, 0
      %p213 = por %p211, %p212
      %p214 = scmp.ne.s32.totalorder %s202, %s203
      %p215 = scmp.eq.s32.totalorder %s31, 1
      %p216 = por %p214, %p215
      %p218 = scmp.ne.s32.totalorder %s203, %s217
      %p219 = scmp.eq.s32.totalorder %s31, 0
      %p220 = por %p218, %p219
      %s222 = sadd.s32 %s221, 1
      %p225 = scmp.eq.s32.totalorder %s25, 1
      %p226 = scmp.ne.s32.totalorder %s221, %s223
      %p227 = scmp.eq.s32.totalorder %s25, 0
      %p228 = por %p226, %p227
      %p229 = scmp.ne.s32.totalorder %s221, %s223
      %p230 = scmp.eq.s32.totalorder %s30, 1
      %p231 = por %p229, %p230
      %p232 = scmp.ne.s32.totalorder %s223, %s224
      %p233 = scmp.eq.s32.totalorder %s30, 0
      %p234 = por %p232, %p233
      %p235 = scmp.ne.s32.totalorder %s223, %s224
      %p236 = scmp.eq.s32.totalorder %s31, 1
      %p237 = por %p235, %p236
      %p239 = scmp.ne.s32.totalorder %s224, %s238
      %p240 = scmp.eq.s32.totalorder %s31, 0
      %p241 = por %p239, %p240
      %s243 = sadd.s32 %s242, 1
      %p246 = scmp.eq.s32.totalorder %s25, 1
      %p247 = scmp.ne.s32.totalorder %s242, %s244
      %p248 = scmp.eq.s32.totalorder %s25, 0
      %p249 = por %p247, %p248
      %p250 = scmp.ne.s32.totalorder %s242, %s244
      %p251 = scmp.eq.s32.totalorder %s30, 1
      %p252 = por %p250, %p251
      %p253 = scmp.ne.s32.totalorder %s244, %s245
      %p254 = scmp.eq.s32.totalorder %s30, 0
      %p255 = por %p253, %p254
      %p256 = scmp.ne.s32.totalorder %s244, %s245
      %p257 = scmp.eq.s32.totalorder %s31, 1
      %p258 = por %p256, %p257
      %p260 = scmp.ne.s32.totalorder %s245, %s259
      %p261 = scmp.eq.s32.totalorder %s31, 0
      %p262 = por %p260, %p261
      %s264 = sadd.s32 %s263, 1
      %p267 = scmp.eq.s32.totalorder %s25, 1
      %p268 = scmp.ne.s32.totalorder %s263, %s265
      %p269 = scmp.eq.s32.totalorder %s25, 0
      %p270 = por %p268, %p269
      %p271 = scmp.ne.s32.totalorder %s263, %s265
      %p272 = scmp.eq.s32.totalorder %s30, 1
      %p273 = por %p271, %p272
      %p274 = scmp.ne.s32.totalorder %s265, %s266
      %p275 = scmp.eq.s32.totalorder %s30, 0
      %p276 = por %p274, %p275
      %p277 = scmp.ne.s32.totalorder %s265, %s266
      %p278 = scmp.eq.s32.totalorder %s31, 1
      %p279 = por %p277, %p278
      %p281 = scmp.ne.s32.totalorder %s266, %s280
      %p282 = scmp.eq.s32.totalorder %s31, 0
      %p283 = por %p281, %p282
      %s284 = ssub.s32 %s25, %s32
      %p285 = scmp.eq.s32.totalorder %s284, 0
      %s287 = sadd.s32 %s286, 1
      %s288 = scalar_select %p285, %s286, %s287
      %p291 = pneg %p285
      %p292 = scmp.eq.s32.totalorder %s25, 1
      %p293 = por %p291, %p292
      %p294 = scmp.ne.s32.totalorder %s286, %s289
      %p295 = scmp.eq.s32.totalorder %s25, 0
      %p296 = por %p294, %p295
      %p297 = scmp.ne.s32.totalorder %s286, %s289
      %p298 = scmp.eq.s32.totalorder %s30, 1
      %p299 = por %p297, %p298
      %p300 = scmp.ne.s32.totalorder %s289, %s290
      %p301 = scmp.eq.s32.totalorder %s30, 0
      %p302 = por %p300, %p301
      %p303 = scmp.ne.s32.totalorder %s289, %s290
      %p304 = scmp.eq.s32.totalorder %s31, 1
      %p305 = por %p303, %p304
      %p307 = scmp.ne.s32.totalorder %s290, %s306
      %p308 = scmp.eq.s32.totalorder %s31, 0
      %p309 = por %p307, %p308
      %p310 = scmp.le.s32.totalorder 1, %s25
      %p311 = scmp.lt.s32.totalorder %s25, 3
      %p312 = pnand %p310, %p311
      %p313 = pneg %p312
      // Predicated region
      $region9: #{tpu_custom_call.1} parent=5 // pred_check
        _
      $region10: #{tpu_custom_call.1} parent=5 // pred_check_branch
        %315 = sbr.rel (%p312) target = $region12
      $region11: #{tpu_custom_call.1} parent=5 // pred_region
        %s316 = ssub.s32 %s25, 1
        // Predicated region
        $region13: #{tpu_custom_call.1} parent=11 // pred_check
          %p317 = pneg %p150
        $region14: #{tpu_custom_call.1} parent=11 // pred_check_branch
          %319 = sbr.rel (%p317) target = $region16
        $region15: #{tpu_custom_call.1} parent=11 // pred_region
          %s321 = ssub.s32 6144, 6144
          %322 = vsyncadd [#allocation7], %s321
          %s323 = sshll.u32 [#allocation8], 4
          %s324 = int_to_ptr.vmem [resolvable:$true] %s323
          %329 = dma.hbm_to_vmem [thread:$0]  %s4, 6144, %s324, [#allocation7], 64, 64, 4
        $region16: #{tpu_custom_call.1} parent=11 // pred_fallthru
          _
        // Predicated region
        $region17: #{tpu_custom_call.1} parent=11 // pred_check
          %p330 = pneg %p171
        $region18: #{tpu_custom_call.1} parent=11 // pred_check_branch
          %332 = sbr.rel (%p330) target = $region20
        $region19: #{tpu_custom_call.1} parent=11 // pred_region
          _
        $region20: #{tpu_custom_call.1} parent=11 // pred_fallthru
          _
        // Predicated region
        $region21: #{tpu_custom_call.1} parent=11 // pred_check
          %p333 = pneg %p192
        $region22: #{tpu_custom_call.1} parent=11 // pred_check_branch
          %335 = sbr.rel (%p333) target = $region24
        $region23: #{tpu_custom_call.1} parent=11 // pred_region
          _
        $region24: #{tpu_custom_call.1} parent=11 // pred_fallthru
          _
        // Predicated region
        $region25: #{tpu_custom_call.1} parent=11 // pred_check
          %p336 = pneg %p213
        $region26: #{tpu_custom_call.1} parent=11 // pred_check_branch
          %338 = sbr.rel (%p336) target = $region28
        $region27: #{tpu_custom_call.1} parent=11 // pred_region
          %s340 = ssub.s32 1024, 1024
          %341 = vsyncadd [#allocation10], %s340
          %s342 = sshll.u32 [#allocation9], 4
          %s343 = int_to_ptr.vmem [resolvable:$true] %s342
          %348 = dma.hbm_to_vmem [thread:$0]  %s7, 1024, %s343, [#allocation10], 64, 64, 4
        $region28: #{tpu_custom_call.1} parent=11 // pred_fallthru
          _
        // Predicated region
        $region29: #{tpu_custom_call.1} parent=11 // pred_check
          %p349 = pneg %p234
        $region30: #{tpu_custom_call.1} parent=11 // pred_check_branch
          %351 = sbr.rel (%p349) target = $region32
        $region31: #{tpu_custom_call.1} parent=11 // pred_region
          _
        $region32: #{tpu_custom_call.1} parent=11 // pred_fallthru
          _
        // Predicated region
        $region33: #{tpu_custom_call.1} parent=11 // pred_check
          %p352 = pneg %p255
        $region34: #{tpu_custom_call.1} parent=11 // pred_check_branch
          %354 = sbr.rel (%p352) target = $region36
        $region35: #{tpu_custom_call.1} parent=11 // pred_region
          _
        $region36: #{tpu_custom_call.1} parent=11 // pred_fallthru
          _
        // Predicated region
        $region37: #{tpu_custom_call.1} parent=11 // pred_check
          %p355 = pneg %p276
        $region38: #{tpu_custom_call.1} parent=11 // pred_check_branch
          %357 = sbr.rel (%p355) target = $region40
        $region39: #{tpu_custom_call.1} parent=11 // pred_region
          _
        $region40: #{tpu_custom_call.1} parent=11 // pred_fallthru
          _
      $region12: #{tpu_custom_call.1} parent=5 // pred_fallthru
        _
      %p358 = scmp.lt.s32.totalorder %s25, 2
      // Predicated region
      $region41: #{tpu_custom_call.1} parent=5 // pred_check
        %p359 = pneg %p358
      $region42: #{tpu_custom_call.1} parent=5 // pred_check_branch
        %361 = sbr.rel (%p359) target = $region44
      $region43: #{tpu_custom_call.1} parent=5 // pred_region
        // Predicated region
        $region45: #{tpu_custom_call.1} parent=43 // pred_check
          %p362 = pneg %p45
        $region46: #{tpu_custom_call.1} parent=43 // pred_check_branch
          %364 = sbr.rel (%p362) target = $region48
        $region47: #{tpu_custom_call.1} parent=43 // pred_region
          %s365 = smul.u32 16, %s25
          %p366 = scmp.lt.s32.totalorder %s365, 31
          %s367 = scalar_select %p366, %s365, 31
          %s368 = smul.addr %s367, 8
          %s369 = scalar_lea.vmem %s0, %s368
          %s370 = smul.u32 16, %s25
        $region48: #{tpu_custom_call.1} parent=43 // pred_fallthru
          _
        // Predicated region
        $region49: #{tpu_custom_call.1} parent=43 // pred_check
          %p371 = pneg %p71
        $region50: #{tpu_custom_call.1} parent=43 // pred_check_branch
          %373 = sbr.rel (%p371) target = $region52
        $region51: #{tpu_custom_call.1} parent=43 // pred_region
          %s374 = sand.u32 %s61, 1
          %s375 = scalar_lea.sflag [#allocation5], %s374
          %s376 = sand.u32 %s61, 1
          %s377 = smul.addr %s376, 128
          %s378 = scalar_lea.vmem [#allocation4], %s377
          %s379 = smul.u32 16, %s25
          %s381 = ssub.s32 2048, 2048
          %382 = vsyncadd %s375, %s381
          %s383 = smul.addr %s379, 128
          %s384 = scalar_lea.hbm %s1, %s383
          %s385 = sshll.u32 %s378, 4
          %s386 = int_to_ptr.vmem [resolvable:$true] %s385
          %391 = dma.hbm_to_vmem [thread:$0]  %s384, 2048, %s386, %s375, 128, 128, 8
        $region52: #{tpu_custom_call.1} parent=43 // pred_fallthru
          _
        // Predicated region
        $region53: #{tpu_custom_call.1} parent=43 // pred_check
          %p392 = pneg %p97
        $region54: #{tpu_custom_call.1} parent=43 // pred_check_branch
          %394 = sbr.rel (%p392) target = $region56
        $region55: #{tpu_custom_call.1} parent=43 // pred_region
          %s395 = sand.u32 %s25, 1
          %s396 = scalar_lea.sflag [#allocation7], %s395
          %s397 = sand.u32 %s87, 1
          %s398 = smul.addr %s397, 128
          %s399 = scalar_lea.vmem [#allocation6], %s398
          %s400 = smul.u32 16, %s25
          %s402 = ssub.s32 2048, 2048
          %403 = vsyncadd %s396, %s402
          %s404 = smul.addr %s400, 128
          %s405 = scalar_lea.hbm %s2, %s404
          %s406 = sshll.u32 %s399, 4
          %s407 = int_to_ptr.vmem [resolvable:$true] %s406
          %412 = dma.hbm_to_vmem [thread:$0]  %s405, 2048, %s407, %s396, 128, 128, 8
        $region56: #{tpu_custom_call.1} parent=43 // pred_fallthru
          _
        // Predicated region
        $region57: #{tpu_custom_call.1} parent=43 // pred_check
          %p413 = pneg %p123
        $region58: #{tpu_custom_call.1} parent=43 // pred_check_branch
          %415 = sbr.rel (%p413) target = $region60
        $region59: #{tpu_custom_call.1} parent=43 // pred_region
          %s416 = smul.u32 16, %s25
          %p417 = scmp.lt.s32.totalorder %s416, 31
          %s418 = scalar_select %p417, %s416, 31
          %s419 = smul.addr %s418, 8
          %s420 = scalar_lea.vmem %s3, %s419
          %s421 = smul.u32 16, %s25
        $region60: #{tpu_custom_call.1} parent=43 // pred_fallthru
          _
      $region44: #{tpu_custom_call.1} parent=5 // pred_fallthru
        _
      %p422 = scmp.le.s32.totalorder 1, %s25
      %p423 = scmp.lt.s32.totalorder %s25, 3
      %p424 = pnand %p422, %p423
      %p425 = pneg %p424
      // Predicated region
      $region61: #{tpu_custom_call.1} parent=5 // pred_check
        _
      $region62: #{tpu_custom_call.1} parent=5 // pred_check_branch
        %427 = sbr.rel (%p424) target = $region64
      $region63: #{tpu_custom_call.1} parent=5 // pred_region
        %s428 = ssub.s32 %s25, 1
        %s429 = sand.u32 %s64, 1
        %s430 = scalar_lea.sflag [#allocation5], %s429
        %s431 = sand.u32 %s64, 1
        %s432 = smul.addr %s431, 128
        %s433 = scalar_lea.vmem [#allocation4], %s432
        // Predicated region
        $region65: #{tpu_custom_call.1} parent=63 // pred_check
          %p434 = pneg %p77
        $region66: #{tpu_custom_call.1} parent=63 // pred_check_branch
          %436 = sbr.rel (%p434) target = $region68
        $region67: #{tpu_custom_call.1} parent=63 // pred_region
          %437 = dma.done %s430, 2048
        $region68: #{tpu_custom_call.1} parent=63 // pred_fallthru
          _
        %s438 = sand.u32 %s30, 1
        %s439 = scalar_lea.sflag [#allocation7], %s438
        %s440 = sand.u32 %s90, 1
        %s441 = smul.addr %s440, 128
        %s442 = scalar_lea.vmem [#allocation6], %s441
        // Predicated region
        $region69: #{tpu_custom_call.1} parent=63 // pred_check
          %p443 = pneg %p103
        $region70: #{tpu_custom_call.1} parent=63 // pred_check_branch
          %445 = sbr.rel (%p443) target = $region72
        $region71: #{tpu_custom_call.1} parent=63 // pred_region
          %446 = dma.done %s439, 2048
        $region72: #{tpu_custom_call.1} parent=63 // pred_fallthru
          _
        // Predicated region
        $region73: #{tpu_custom_call.1} parent=63 // pred_check
          %p447 = pneg %p150
        $region74: #{tpu_custom_call.1} parent=63 // pred_check_branch
          %449 = sbr.rel (%p447) target = $region76
        $region75: #{tpu_custom_call.1} parent=63 // pred_region
          %450 = dma.done [#allocation7], 6144
        $region76: #{tpu_custom_call.1} parent=63 // pred_fallthru
          _
        // Predicated region
        $region77: #{tpu_custom_call.1} parent=63 // pred_check
          %p451 = pneg %p213
        $region78: #{tpu_custom_call.1} parent=63 // pred_check_branch
          %453 = sbr.rel (%p451) target = $region80
        $region79: #{tpu_custom_call.1} parent=63 // pred_region
          %454 = dma.done [#allocation10], 1024
        $region80: #{tpu_custom_call.1} parent=63 // pred_fallthru
          _
        %s455 = smul.u32 16, %s30
        %p456 = scmp.lt.s32.totalorder %s455, 31
        %s457 = scalar_select %p456, %s455, 31
        %s458 = smul.addr %s457, 8
        %s459 = scalar_lea.vmem %s0, %s458
        %p460 = pneg %p51
        %p461 = pneg %p48
        %s462 = sand.u32 %s64, 1
        %s463 = scalar_lea.sflag [#allocation5], %s462
        %s464 = sand.u32 %s64, 1
        %s465 = smul.addr %s464, 128
        %s466 = scalar_lea.vmem [#allocation4], %s465
        %p467 = pneg %p77
        %p468 = pneg %p74
        %s469 = sand.u32 %s30, 1
        %s470 = scalar_lea.sflag [#allocation7], %s469
        %s471 = sand.u32 %s90, 1
        %s472 = smul.addr %s471, 128
        %s473 = scalar_lea.vmem [#allocation6], %s472
        %p474 = pneg %p103
        %p475 = pneg %p100
        %s476 = smul.u32 16, %s30
        %p477 = scmp.lt.s32.totalorder %s476, 31
        %s478 = scalar_select %p477, %s476, 31
        %s479 = smul.addr %s478, 8
        %s480 = scalar_lea.vmem %s3, %s479
        %p481 = pneg %p129
        %p482 = pneg %p126
        %p483 = pneg %p150
        %p484 = pneg %p147
        %p485 = pneg %p171
        %p486 = pneg %p168
        %p487 = pneg %p192
        %p488 = pneg %p189
        %p489 = pneg %p213
        %p490 = pneg %p210
        %p491 = pneg %p234
        %p492 = pneg %p231
        %p493 = pneg %p255
        %p494 = pneg %p252
        %p495 = pneg %p276
        %p496 = pneg %p273
        %p497 = pneg %p302
        %p498 = pneg %p299
        %s499 = smul.u32 16, %s30
        %p500 = scmp.lt.s32.totalorder %s499, 31
        %s501 = scalar_select %p500, %s499, 31
        %s502 = smul.addr %s501, 8
        %s503 = scalar_lea.vmem %s11, %s502
        %s504 = smul.u32 16, %s30
        %p505 = scmp.lt.s32.totalorder %s504, 31
        %s506 = scalar_select %p505, %s504, 31
        %s507 = smul.addr %s506, 8
        %s508 = scalar_lea.vmem %s0, %s507
        %s509 = smul.u32 16, %s30
        %s510 = smul.u32 16, %s30
        %s511 = smul.u32 16, %s30
        %s512 = smul.u32 16, %s30
        %p513 = scmp.lt.s32.totalorder %s512, 31
        %s514 = scalar_select %p513, %s512, 31
        %s515 = smul.addr %s514, 8
        %s516 = scalar_lea.vmem %s3, %s515
        %s517 = smul.u32 16, %s30
        %s518 = smul.u32 16, %s30
        %p519 = scmp.lt.s32.totalorder %s518, 31
        %s520 = scalar_select %p519, %s518, 31
        %s521 = smul.addr %s520, 8
        %s522 = scalar_lea.vmem %s11, %s521
        %s523 = smul.u32 16, %s30
        %v525 = vld [vmem:[%s508] sm:$0xff]
        %v526 = vld [vmem:[%s508 + $0x8] sm:$0xff]
        %v527 = vld [vmem:[%s508 + $0x10] sm:$0xff]
        %v528 = vld [vmem:[%s508 + $0x18] sm:$0xff]
        %v529 = vld [vmem:[%s508 + $0x20] sm:$0xff]
        %v530 = vld [vmem:[%s508 + $0x28] sm:$0xff]
        %v531 = vld [vmem:[%s508 + $0x30] sm:$0xff]
        %v532 = vld [vmem:[%s508 + $0x38] sm:$0xff]
        %v533 = vld [vmem:[%s508 + $0x40] sm:$0xff]
        %v534 = vld [vmem:[%s508 + $0x48] sm:$0xff]
        %v535 = vld [vmem:[%s508 + $0x50] sm:$0xff]
        %v536 = vld [vmem:[%s508 + $0x58] sm:$0xff]
        %v537 = vld [vmem:[%s508 + $0x60] sm:$0xff]
        %v538 = vld [vmem:[%s508 + $0x68] sm:$0xff]
        %v539 = vld [vmem:[%s508 + $0x70] sm:$0xff]
        %v540 = vld [vmem:[%s508 + $0x78] sm:$0xff]
        %v541 = vld [vmem:[%s433] sm:$0xff]
        %v542 = vld [vmem:[%s433 + $0x8] sm:$0xff]
        %v543 = vld [vmem:[%s433 + $0x10] sm:$0xff]
        %v544 = vld [vmem:[%s433 + $0x18] sm:$0xff]
        %v545 = vld [vmem:[%s433 + $0x20] sm:$0xff]
        %v546 = vld [vmem:[%s433 + $0x28] sm:$0xff]
        %v547 = vld [vmem:[%s433 + $0x30] sm:$0xff]
        %v548 = vld [vmem:[%s433 + $0x38] sm:$0xff]
        %v549 = vld [vmem:[%s433 + $0x40] sm:$0xff]
        %v550 = vld [vmem:[%s433 + $0x48] sm:$0xff]
        %v551 = vld [vmem:[%s433 + $0x50] sm:$0xff]
        %v552 = vld [vmem:[%s433 + $0x58] sm:$0xff]
        %v553 = vld [vmem:[%s433 + $0x60] sm:$0xff]
        %v554 = vld [vmem:[%s433 + $0x68] sm:$0xff]
        %v555 = vld [vmem:[%s433 + $0x70] sm:$0xff]
        %v556 = vld [vmem:[%s433 + $0x78] sm:$0xff]
        %v557 = vld [vmem:[%s442] sm:$0xff]
        %v558 = vld [vmem:[%s442 + $0x8] sm:$0xff]
        %v559 = vld [vmem:[%s442 + $0x10] sm:$0xff]
        %v560 = vld [vmem:[%s442 + $0x18] sm:$0xff]
        %v561 = vld [vmem:[%s442 + $0x20] sm:$0xff]
        %v562 = vld [vmem:[%s442 + $0x28] sm:$0xff]
        %v563 = vld [vmem:[%s442 + $0x30] sm:$0xff]
        %v564 = vld [vmem:[%s442 + $0x38] sm:$0xff]
        %v565 = vld [vmem:[%s442 + $0x40] sm:$0xff]
        %v566 = vld [vmem:[%s442 + $0x48] sm:$0xff]
        %v567 = vld [vmem:[%s442 + $0x50] sm:$0xff]
        %v568 = vld [vmem:[%s442 + $0x58] sm:$0xff]
        %v569 = vld [vmem:[%s442 + $0x60] sm:$0xff]
        %v570 = vld [vmem:[%s442 + $0x68] sm:$0xff]
        %v571 = vld [vmem:[%s442 + $0x70] sm:$0xff]
        %v572 = vld [vmem:[%s442 + $0x78] sm:$0xff]
        %v573 = vld [vmem:[%s516] sm:$0xff]
        %v574 = vld [vmem:[%s516 + $0x8] sm:$0xff]
        %v575 = vld [vmem:[%s516 + $0x10] sm:$0xff]
        %v576 = vld [vmem:[%s516 + $0x18] sm:$0xff]
        %v577 = vld [vmem:[%s516 + $0x20] sm:$0xff]
        %v578 = vld [vmem:[%s516 + $0x28] sm:$0xff]
        %v579 = vld [vmem:[%s516 + $0x30] sm:$0xff]
        %v580 = vld [vmem:[%s516 + $0x38] sm:$0xff]
        %v581 = vld [vmem:[%s516 + $0x40] sm:$0xff]
        %v582 = vld [vmem:[%s516 + $0x48] sm:$0xff]
        %v583 = vld [vmem:[%s516 + $0x50] sm:$0xff]
        %v584 = vld [vmem:[%s516 + $0x58] sm:$0xff]
        %v585 = vld [vmem:[%s516 + $0x60] sm:$0xff]
        %v586 = vld [vmem:[%s516 + $0x68] sm:$0xff]
        %v587 = vld [vmem:[%s516 + $0x70] sm:$0xff]
        %v588 = vld [vmem:[%s516 + $0x78] sm:$0xff]
        %v589 = vmul.f32 %v525, %v541
        %v590 = vmul.f32 %v526, %v542
        %v591 = vmul.f32 %v527, %v543
        %v592 = vmul.f32 %v528, %v544
        %v593 = vmul.f32 %v529, %v545
        %v594 = vmul.f32 %v530, %v546
        %v595 = vmul.f32 %v531, %v547
        %v596 = vmul.f32 %v532, %v548
        %v597 = vmul.f32 %v533, %v549
        %v598 = vmul.f32 %v534, %v550
        %v599 = vmul.f32 %v535, %v551
        %v600 = vmul.f32 %v536, %v552
        %v601 = vmul.f32 %v537, %v553
        %v602 = vmul.f32 %v538, %v554
        %v603 = vmul.f32 %v539, %v555
        %v604 = vmul.f32 %v540, %v556
        %605 = vadd.xlane.f32.xlu0 %v589
        %v606 = vpop.xlane.xlu0 %605
        %607 = vadd.xlane.f32.xlu0 %v590
        %v608 = vpop.xlane.xlu0 %607
        %609 = vadd.xlane.f32.xlu0 %v591
        %v610 = vpop.xlane.xlu0 %609
        %611 = vadd.xlane.f32.xlu0 %v592
        %v612 = vpop.xlane.xlu0 %611
        %613 = vadd.xlane.f32.xlu0 %v593
        %v614 = vpop.xlane.xlu0 %613
        %615 = vadd.xlane.f32.xlu0 %v594
        %v616 = vpop.xlane.xlu0 %615
        %617 = vadd.xlane.f32.xlu0 %v595
        %v618 = vpop.xlane.xlu0 %617
        %619 = vadd.xlane.f32.xlu0 %v596
        %v620 = vpop.xlane.xlu0 %619
        %621 = vadd.xlane.f32.xlu0 %v597
        %v622 = vpop.xlane.xlu0 %621
        %623 = vadd.xlane.f32.xlu0 %v598
        %v624 = vpop.xlane.xlu0 %623
        %625 = vadd.xlane.f32.xlu0 %v599
        %v626 = vpop.xlane.xlu0 %625
        %627 = vadd.xlane.f32.xlu0 %v600
        %v628 = vpop.xlane.xlu0 %627
        %629 = vadd.xlane.f32.xlu0 %v601
        %v630 = vpop.xlane.xlu0 %629
        %631 = vadd.xlane.f32.xlu0 %v602
        %v632 = vpop.xlane.xlu0 %631
        %633 = vadd.xlane.f32.xlu0 %v603
        %v634 = vpop.xlane.xlu0 %633
        %635 = vadd.xlane.f32.xlu0 %v604
        %v636 = vpop.xlane.xlu0 %635
        %v637 = vmul.f32 %v525, %v557
        %v638 = vmul.f32 %v526, %v558
        %v639 = vmul.f32 %v527, %v559
        %v640 = vmul.f32 %v528, %v560
        %v641 = vmul.f32 %v529, %v561
        %v642 = vmul.f32 %v530, %v562
        %v643 = vmul.f32 %v531, %v563
        %v644 = vmul.f32 %v532, %v564
        %v645 = vmul.f32 %v533, %v565
        %v646 = vmul.f32 %v534, %v566
        %v647 = vmul.f32 %v535, %v567
        %v648 = vmul.f32 %v536, %v568
        %v649 = vmul.f32 %v537, %v569
        %v650 = vmul.f32 %v538, %v570
        %v651 = vmul.f32 %v539, %v571
        %v652 = vmul.f32 %v540, %v572
        %653 = vadd.xlane.f32.xlu0 %v637
        %v654 = vpop.xlane.xlu0 %653
        %655 = vadd.xlane.f32.xlu0 %v638
        %v656 = vpop.xlane.xlu0 %655
        %657 = vadd.xlane.f32.xlu0 %v639
        %v658 = vpop.xlane.xlu0 %657
        %659 = vadd.xlane.f32.xlu0 %v640
        %v660 = vpop.xlane.xlu0 %659
        %661 = vadd.xlane.f32.xlu0 %v641
        %v662 = vpop.xlane.xlu0 %661
        %663 = vadd.xlane.f32.xlu0 %v642
        %v664 = vpop.xlane.xlu0 %663
        %665 = vadd.xlane.f32.xlu0 %v643
        %v666 = vpop.xlane.xlu0 %665
        %667 = vadd.xlane.f32.xlu0 %v644
        %v668 = vpop.xlane.xlu0 %667
        %669 = vadd.xlane.f32.xlu0 %v645
        %v670 = vpop.xlane.xlu0 %669
        %671 = vadd.xlane.f32.xlu0 %v646
        %v672 = vpop.xlane.xlu0 %671
        %673 = vadd.xlane.f32.xlu0 %v647
        %v674 = vpop.xlane.xlu0 %673
        %675 = vadd.xlane.f32.xlu0 %v648
        %v676 = vpop.xlane.xlu0 %675
        %677 = vadd.xlane.f32.xlu0 %v649
        %v678 = vpop.xlane.xlu0 %677
        %679 = vadd.xlane.f32.xlu0 %v650
        %v680 = vpop.xlane.xlu0 %679
        %681 = vadd.xlane.f32.xlu0 %v651
        %v682 = vpop.xlane.xlu0 %681
        %683 = vadd.xlane.f32.xlu0 %v652
        %v684 = vpop.xlane.xlu0 %683
        %v685 = vpack.c.bf16 %v526, %v525
        %v686 = vpack.c.bf16 %v528, %v527
        %v687 = vpack.c.bf16 %v530, %v529
        %v688 = vpack.c.bf16 %v532, %v531
        %v689 = vpack.c.bf16 %v534, %v533
        %v690 = vpack.c.bf16 %v536, %v535
        %v691 = vpack.c.bf16 %v538, %v537
        %v692 = vpack.c.bf16 %v540, %v539
        %693 = vst [vmem:[#allocation2] sm:$0xff] %v685
        %694 = vst [vmem:[#allocation2 + $0x30] sm:$0xff] %v686
        %695 = vst [vmem:[#allocation2 + $0x60] sm:$0xff] %v687
        %696 = vst [vmem:[#allocation2 + $0x90] sm:$0xff] %v688
        %697 = vst [vmem:[#allocation2 + $0xc0] sm:$0xff] %v689
        %698 = vst [vmem:[#allocation2 + $0xf0] sm:$0xff] %v690
        %699 = vst [vmem:[#allocation2 + $0x120] sm:$0xff] %v691
        %700 = vst [vmem:[#allocation2 + $0x150] sm:$0xff] %v692
        %v701 = vpack.c.bf16 %v542, %v541
        %v702 = vpack.c.bf16 %v544, %v543
        %v703 = vpack.c.bf16 %v546, %v545
        %v704 = vpack.c.bf16 %v548, %v547
        %v705 = vpack.c.bf16 %v550, %v549
        %v706 = vpack.c.bf16 %v552, %v551
        %v707 = vpack.c.bf16 %v554, %v553
        %v708 = vpack.c.bf16 %v556, %v555
        %709 = vst [vmem:[#allocation2 + $0x8] sm:$0xff] %v701
        %710 = vst [vmem:[#allocation2 + $0x38] sm:$0xff] %v702
        %711 = vst [vmem:[#allocation2 + $0x68] sm:$0xff] %v703
        %712 = vst [vmem:[#allocation2 + $0x98] sm:$0xff] %v704
        %713 = vst [vmem:[#allocation2 + $0xc8] sm:$0xff] %v705
        %714 = vst [vmem:[#allocation2 + $0xf8] sm:$0xff] %v706
        %715 = vst [vmem:[#allocation2 + $0x128] sm:$0xff] %v707
        %716 = vst [vmem:[#allocation2 + $0x158] sm:$0xff] %v708
        %v717 = vpack.c.bf16 %v558, %v557
        %v718 = vpack.c.bf16 %v560, %v559
        %v719 = vpack.c.bf16 %v562, %v561
        %v720 = vpack.c.bf16 %v564, %v563
        %v721 = vpack.c.bf16 %v566, %v565
        %v722 = vpack.c.bf16 %v568, %v567
        %v723 = vpack.c.bf16 %v570, %v569
        %v724 = vpack.c.bf16 %v572, %v571
        %725 = vst [vmem:[#allocation2 + $0x10] sm:$0xff] %v717
        %726 = vst [vmem:[#allocation2 + $0x40] sm:$0xff] %v718
        %727 = vst [vmem:[#allocation2 + $0x70] sm:$0xff] %v719
        %728 = vst [vmem:[#allocation2 + $0xa0] sm:$0xff] %v720
        %729 = vst [vmem:[#allocation2 + $0xd0] sm:$0xff] %v721
        %730 = vst [vmem:[#allocation2 + $0x100] sm:$0xff] %v722
        %731 = vst [vmem:[#allocation2 + $0x130] sm:$0xff] %v723
        %732 = vst [vmem:[#allocation2 + $0x160] sm:$0xff] %v724
        %v733 = vld [vmem:[#allocation2] sm:$0xff]
        %v734 = vld [vmem:[#allocation2 + $0x8] sm:$0xff]
        %v735 = vld [vmem:[#allocation2 + $0x10] sm:$0xff]
        %v736 = vld [vmem:[#allocation2 + $0x30] sm:$0xff]
        %v737 = vld [vmem:[#allocation2 + $0x38] sm:$0xff]
        %v738 = vld [vmem:[#allocation2 + $0x40] sm:$0xff]
        %v739 = vld [vmem:[#allocation2 + $0x60] sm:$0xff]
        %v740 = vld [vmem:[#allocation2 + $0x68] sm:$0xff]
        %v741 = vld [vmem:[#allocation2 + $0x70] sm:$0xff]
        %v742 = vld [vmem:[#allocation2 + $0x90] sm:$0xff]
        %v743 = vld [vmem:[#allocation2 + $0x98] sm:$0xff]
        %v744 = vld [vmem:[#allocation2 + $0xa0] sm:$0xff]
        %v745 = vld [vmem:[#allocation2 + $0xc0] sm:$0xff]
        %v746 = vld [vmem:[#allocation2 + $0xc8] sm:$0xff]
        %v747 = vld [vmem:[#allocation2 + $0xd0] sm:$0xff]
        %v748 = vld [vmem:[#allocation2 + $0xf0] sm:$0xff]
        %v749 = vld [vmem:[#allocation2 + $0xf8] sm:$0xff]
        %v750 = vld [vmem:[#allocation2 + $0x100] sm:$0xff]
        %v751 = vld [vmem:[#allocation2 + $0x120] sm:$0xff]
        %v752 = vld [vmem:[#allocation2 + $0x128] sm:$0xff]
        %v753 = vld [vmem:[#allocation2 + $0x130] sm:$0xff]
        %v754 = vld [vmem:[#allocation2 + $0x150] sm:$0xff]
        %v755 = vld [vmem:[#allocation2 + $0x158] sm:$0xff]
        %v756 = vld [vmem:[#allocation2 + $0x160] sm:$0xff]
        %v757 = vld [vmem:[#allocation8] sm:$0xf]
        %v758 = vld [vmem:[#allocation8 + $0x4] sm:$0xf]
        %v759 = vld [vmem:[#allocation8 + $0x8] sm:$0xf]
        %v760 = vld [vmem:[#allocation8 + $0xc] sm:$0xf]
        %v761 = vld [vmem:[#allocation8 + $0x10] sm:$0xf]
        %v762 = vld [vmem:[#allocation8 + $0x14] sm:$0xf]
        %v763 = vld [vmem:[#allocation8 + $0x18] sm:$0xf]
        %v764 = vld [vmem:[#allocation8 + $0x1c] sm:$0xf]
        %v765 = vld [vmem:[#allocation8 + $0x20] sm:$0xf]
        %v766 = vld [vmem:[#allocation8 + $0x24] sm:$0xf]
        %v767 = vld [vmem:[#allocation8 + $0x28] sm:$0xf]
        %v768 = vld [vmem:[#allocation8 + $0x2c] sm:$0xf]
        %v769 = vld [vmem:[#allocation8 + $0x30] sm:$0xf]
        %v770 = vld [vmem:[#allocation8 + $0x34] sm:$0xf]
        %v771 = vld [vmem:[#allocation8 + $0x38] sm:$0xf]
        %v772 = vld [vmem:[#allocation8 + $0x3c] sm:$0xf]
        %v773 = vld [vmem:[#allocation8 + $0x40] sm:$0xf]
        %v774 = vld [vmem:[#allocation8 + $0x44] sm:$0xf]
        %v775 = vld [vmem:[#allocation8 + $0x48] sm:$0xf]
        %v776 = vld [vmem:[#allocation8 + $0x4c] sm:$0xf]
        %v777 = vld [vmem:[#allocation8 + $0x50] sm:$0xf]
        %v778 = vld [vmem:[#allocation8 + $0x54] sm:$0xf]
        %v779 = vld [vmem:[#allocation8 + $0x58] sm:$0xf]
        %v780 = vld [vmem:[#allocation8 + $0x5c] sm:$0xf]
        %v781 = vld [vmem:[#allocation8 + $0x60] sm:$0xf]
        %v782 = vld [vmem:[#allocation8 + $0x64] sm:$0xf]
        %v783 = vld [vmem:[#allocation8 + $0x68] sm:$0xf]
        %v784 = vld [vmem:[#allocation8 + $0x6c] sm:$0xf]
        %v785 = vld [vmem:[#allocation8 + $0x70] sm:$0xf]
        %v786 = vld [vmem:[#allocation8 + $0x74] sm:$0xf]
        %v787 = vld [vmem:[#allocation8 + $0x78] sm:$0xf]
        %v788 = vld [vmem:[#allocation8 + $0x7c] sm:$0xf]
        %v789 = vld [vmem:[#allocation8 + $0x80] sm:$0xf]
        %v790 = vld [vmem:[#allocation8 + $0x84] sm:$0xf]
        %v791 = vld [vmem:[#allocation8 + $0x88] sm:$0xf]
        %v792 = vld [vmem:[#allocation8 + $0x8c] sm:$0xf]
        %v793 = vld [vmem:[#allocation8 + $0x90] sm:$0xf]
        %v794 = vld [vmem:[#allocation8 + $0x94] sm:$0xf]
        %v795 = vld [vmem:[#allocation8 + $0x98] sm:$0xf]
        %v796 = vld [vmem:[#allocation8 + $0x9c] sm:$0xf]
        %v797 = vld [vmem:[#allocation8 + $0xa0] sm:$0xf]
        %v798 = vld [vmem:[#allocation8 + $0xa4] sm:$0xf]
        %v799 = vld [vmem:[#allocation8 + $0xa8] sm:$0xf]
        %v800 = vld [vmem:[#allocation8 + $0xac] sm:$0xf]
        %v801 = vld [vmem:[#allocation8 + $0xb0] sm:$0xf]
        %v802 = vld [vmem:[#allocation8 + $0xb4] sm:$0xf]
        %v803 = vld [vmem:[#allocation8 + $0xb8] sm:$0xf]
        %v804 = vld [vmem:[#allocation8 + $0xbc] sm:$0xf]
        %v805 = vmul.f32 %v541, %v557
        %v806 = vmul.f32 %v542, %v558
        %v807 = vmul.f32 %v543, %v559
        %v808 = vmul.f32 %v544, %v560
        %v809 = vmul.f32 %v545, %v561
        %v810 = vmul.f32 %v546, %v562
        %v811 = vmul.f32 %v547, %v563
        %v812 = vmul.f32 %v548, %v564
        %v813 = vmul.f32 %v549, %v565
        %v814 = vmul.f32 %v550, %v566
        %v815 = vmul.f32 %v551, %v567
        %v816 = vmul.f32 %v552, %v568
        %v817 = vmul.f32 %v553, %v569
        %v818 = vmul.f32 %v554, %v570
        %v819 = vmul.f32 %v555, %v571
        %v820 = vmul.f32 %v556, %v572
        %v821 = vpack.c.bf16 %v806, %v805
        %v822 = vpack.c.bf16 %v808, %v807
        %v823 = vpack.c.bf16 %v810, %v809
        %v824 = vpack.c.bf16 %v812, %v811
        %v825 = vpack.c.bf16 %v814, %v813
        %v826 = vpack.c.bf16 %v816, %v815
        %v827 = vpack.c.bf16 %v818, %v817
        %v828 = vpack.c.bf16 %v820, %v819
        %829 = vst [vmem:[#allocation2 + $0x18] sm:$0xff] %v821
        %830 = vst [vmem:[#allocation2 + $0x48] sm:$0xff] %v822
        %831 = vst [vmem:[#allocation2 + $0x78] sm:$0xff] %v823
        %832 = vst [vmem:[#allocation2 + $0xa8] sm:$0xff] %v824
        %833 = vst [vmem:[#allocation2 + $0xd8] sm:$0xff] %v825
        %834 = vst [vmem:[#allocation2 + $0x108] sm:$0xff] %v826
        %835 = vst [vmem:[#allocation2 + $0x138] sm:$0xff] %v827
        %836 = vst [vmem:[#allocation2 + $0x168] sm:$0xff] %v828
        %v837 = vpack.c.bf16 %v590, %v589
        %v838 = vpack.c.bf16 %v592, %v591
        %v839 = vpack.c.bf16 %v594, %v593
        %v840 = vpack.c.bf16 %v596, %v595
        %v841 = vpack.c.bf16 %v598, %v597
        %v842 = vpack.c.bf16 %v600, %v599
        %v843 = vpack.c.bf16 %v602, %v601
        %v844 = vpack.c.bf16 %v604, %v603
        %845 = vst [vmem:[#allocation2 + $0x20] sm:$0xff] %v837
        %846 = vst [vmem:[#allocation2 + $0x50] sm:$0xff] %v838
        %847 = vst [vmem:[#allocation2 + $0x80] sm:$0xff] %v839
        %848 = vst [vmem:[#allocation2 + $0xb0] sm:$0xff] %v840
        %849 = vst [vmem:[#allocation2 + $0xe0] sm:$0xff] %v841
        %850 = vst [vmem:[#allocation2 + $0x110] sm:$0xff] %v842
        %851 = vst [vmem:[#allocation2 + $0x140] sm:$0xff] %v843
        %852 = vst [vmem:[#allocation2 + $0x170] sm:$0xff] %v844
        %v853 = vpack.c.bf16 %v638, %v637
        %v854 = vpack.c.bf16 %v640, %v639
        %v855 = vpack.c.bf16 %v642, %v641
        %v856 = vpack.c.bf16 %v644, %v643
        %v857 = vpack.c.bf16 %v646, %v645
        %v858 = vpack.c.bf16 %v648, %v647
        %v859 = vpack.c.bf16 %v650, %v649
        %v860 = vpack.c.bf16 %v652, %v651
        %861 = vst [vmem:[#allocation2 + $0x28] sm:$0xff] %v853
        %862 = vst [vmem:[#allocation2 + $0x58] sm:$0xff] %v854
        %863 = vst [vmem:[#allocation2 + $0x88] sm:$0xff] %v855
        %864 = vst [vmem:[#allocation2 + $0xb8] sm:$0xff] %v856
        %865 = vst [vmem:[#allocation2 + $0xe8] sm:$0xff] %v857
        %866 = vst [vmem:[#allocation2 + $0x118] sm:$0xff] %v858
        %867 = vst [vmem:[#allocation2 + $0x148] sm:$0xff] %v859
        %868 = vst [vmem:[#allocation2 + $0x178] sm:$0xff] %v860
        %v869 = vld [vmem:[#allocation2 + $0x18] sm:$0xff]
        %v870 = vld [vmem:[#allocation2 + $0x20] sm:$0xff]
        %v871 = vld [vmem:[#allocation2 + $0x28] sm:$0xff]
        %v872 = vld [vmem:[#allocation2 + $0x48] sm:$0xff]
        %v873 = vld [vmem:[#allocation2 + $0x50] sm:$0xff]
        %v874 = vld [vmem:[#allocation2 + $0x58] sm:$0xff]
        %v875 = vld [vmem:[#allocation2 + $0x78] sm:$0xff]
        %v876 = vld [vmem:[#allocation2 + $0x80] sm:$0xff]
        %v877 = vld [vmem:[#allocation2 + $0x88] sm:$0xff]
        %v878 = vld [vmem:[#allocation2 + $0xa8] sm:$0xff]
        %v879 = vld [vmem:[#allocation2 + $0xb0] sm:$0xff]
        %v880 = vld [vmem:[#allocation2 + $0xb8] sm:$0xff]
        %v881 = vld [vmem:[#allocation2 + $0xd8] sm:$0xff]
        %v882 = vld [vmem:[#allocation2 + $0xe0] sm:$0xff]
        %v883 = vld [vmem:[#allocation2 + $0xe8] sm:$0xff]
        %v884 = vld [vmem:[#allocation2 + $0x108] sm:$0xff]
        %v885 = vld [vmem:[#allocation2 + $0x110] sm:$0xff]
        %v886 = vld [vmem:[#allocation2 + $0x118] sm:$0xff]
        %v887 = vld [vmem:[#allocation2 + $0x138] sm:$0xff]
        %v888 = vld [vmem:[#allocation2 + $0x140] sm:$0xff]
        %v889 = vld [vmem:[#allocation2 + $0x148] sm:$0xff]
        %v890 = vld [vmem:[#allocation2 + $0x168] sm:$0xff]
        %v891 = vld [vmem:[#allocation2 + $0x170] sm:$0xff]
        %v892 = vld [vmem:[#allocation2 + $0x178] sm:$0xff]
        %v893 = vld [vmem:[#allocation8 + $0xc0] sm:$0xf]
        %v894 = vld [vmem:[#allocation8 + $0xc4] sm:$0xf]
        %v895 = vld [vmem:[#allocation8 + $0xc8] sm:$0xf]
        %v896 = vld [vmem:[#allocation8 + $0xcc] sm:$0xf]
        %v897 = vld [vmem:[#allocation8 + $0xd0] sm:$0xf]
        %v898 = vld [vmem:[#allocation8 + $0xd4] sm:$0xf]
        %v899 = vld [vmem:[#allocation8 + $0xd8] sm:$0xf]
        %v900 = vld [vmem:[#allocation8 + $0xdc] sm:$0xf]
        %v901 = vld [vmem:[#allocation8 + $0xe0] sm:$0xf]
        %v902 = vld [vmem:[#allocation8 + $0xe4] sm:$0xf]
        %v903 = vld [vmem:[#allocation8 + $0xe8] sm:$0xf]
        %v904 = vld [vmem:[#allocation8 + $0xec] sm:$0xf]
        %v905 = vld [vmem:[#allocation8 + $0xf0] sm:$0xf]
        %v906 = vld [vmem:[#allocation8 + $0xf4] sm:$0xf]
        %v907 = vld [vmem:[#allocation8 + $0xf8] sm:$0xf]
        %v908 = vld [vmem:[#allocation8 + $0xfc] sm:$0xf]
        %v909 = vld [vmem:[#allocation8 + $0x100] sm:$0xf]
        %v910 = vld [vmem:[#allocation8 + $0x104] sm:$0xf]
        %v911 = vld [vmem:[#allocation8 + $0x108] sm:$0xf]
        %v912 = vld [vmem:[#allocation8 + $0x10c] sm:$0xf]
        %v913 = vld [vmem:[#allocation8 + $0x110] sm:$0xf]
        %v914 = vld [vmem:[#allocation8 + $0x114] sm:$0xf]
        %v915 = vld [vmem:[#allocation8 + $0x118] sm:$0xf]
        %v916 = vld [vmem:[#allocation8 + $0x11c] sm:$0xf]
        %v917 = vld [vmem:[#allocation8 + $0x120] sm:$0xf]
        %v918 = vld [vmem:[#allocation8 + $0x124] sm:$0xf]
        %v919 = vld [vmem:[#allocation8 + $0x128] sm:$0xf]
        %v920 = vld [vmem:[#allocation8 + $0x12c] sm:$0xf]
        %v921 = vld [vmem:[#allocation8 + $0x130] sm:$0xf]
        %v922 = vld [vmem:[#allocation8 + $0x134] sm:$0xf]
        %v923 = vld [vmem:[#allocation8 + $0x138] sm:$0xf]
        %v924 = vld [vmem:[#allocation8 + $0x13c] sm:$0xf]
        %v925 = vld [vmem:[#allocation8 + $0x140] sm:$0xf]
        %v926 = vld [vmem:[#allocation8 + $0x144] sm:$0xf]
        %v927 = vld [vmem:[#allocation8 + $0x148] sm:$0xf]
        %v928 = vld [vmem:[#allocation8 + $0x14c] sm:$0xf]
        %v929 = vld [vmem:[#allocation8 + $0x150] sm:$0xf]
        %v930 = vld [vmem:[#allocation8 + $0x154] sm:$0xf]
        %v931 = vld [vmem:[#allocation8 + $0x158] sm:$0xf]
        %v932 = vld [vmem:[#allocation8 + $0x15c] sm:$0xf]
        %v933 = vld [vmem:[#allocation8 + $0x160] sm:$0xf]
        %v934 = vld [vmem:[#allocation8 + $0x164] sm:$0xf]
        %v935 = vld [vmem:[#allocation8 + $0x168] sm:$0xf]
        %v936 = vld [vmem:[#allocation8 + $0x16c] sm:$0xf]
        %v937 = vld [vmem:[#allocation8 + $0x170] sm:$0xf]
        %v938 = vld [vmem:[#allocation8 + $0x174] sm:$0xf]
        %v939 = vld [vmem:[#allocation8 + $0x178] sm:$0xf]
        %v940 = vld [vmem:[#allocation8 + $0x17c] sm:$0xf]
        %v989 = vunpack.c.l.b16 %v893
        %v990 = vunpack.c.l.b16 %v894
        %v991 = vunpack.c.l.b16 %v895
        %v992 = vunpack.c.l.b16 %v896
        %v993 = vunpack.c.l.b16 %v897
        %v994 = vunpack.c.l.b16 %v898
        %v995 = vunpack.c.l.b16 %v899
        %v996 = vunpack.c.l.b16 %v900
        %v997 = vunpack.c.l.b16 %v901
        %v998 = vunpack.c.l.b16 %v902
        %v999 = vunpack.c.l.b16 %v903
        %v1000 = vunpack.c.l.b16 %v904
        %v1001 = vunpack.c.l.b16 %v905
        %v1002 = vunpack.c.l.b16 %v906
        %v1003 = vunpack.c.l.b16 %v907
        %v1004 = vunpack.c.l.b16 %v908
        %v1005 = vunpack.c.l.b16 %v909
        %v1006 = vunpack.c.l.b16 %v910
        %v1007 = vunpack.c.l.b16 %v911
        %v1008 = vunpack.c.l.b16 %v912
        %v1009 = vunpack.c.l.b16 %v913
        %v1010 = vunpack.c.l.b16 %v914
        %v1011 = vunpack.c.l.b16 %v915
        %v1012 = vunpack.c.l.b16 %v916
        %v1013 = vunpack.c.l.b16 %v917
        %v1014 = vunpack.c.l.b16 %v918
        %v1015 = vunpack.c.l.b16 %v919
        %v1016 = vunpack.c.l.b16 %v920
        %v1017 = vunpack.c.l.b16 %v921
        %v1018 = vunpack.c.l.b16 %v922
        %v1019 = vunpack.c.l.b16 %v923
        %v1020 = vunpack.c.l.b16 %v924
        %v1021 = vunpack.c.l.b16 %v925
        %v1022 = vunpack.c.l.b16 %v926
        %v1023 = vunpack.c.l.b16 %v927
        %v1024 = vunpack.c.l.b16 %v928
        %v1025 = vunpack.c.l.b16 %v929
        %v1026 = vunpack.c.l.b16 %v930
        %v1027 = vunpack.c.l.b16 %v931
        %v1028 = vunpack.c.l.b16 %v932
        %v1029 = vunpack.c.l.b16 %v933
        %v1030 = vunpack.c.l.b16 %v934
        %v1031 = vunpack.c.l.b16 %v935
        %v1032 = vunpack.c.l.b16 %v936
        %v1033 = vunpack.c.l.b16 %v937
        %v1034 = vunpack.c.l.b16 %v938
        %v1035 = vunpack.c.l.b16 %v939
        %v1036 = vunpack.c.l.b16 %v940
        %v1037 = vpack.c.b16 %v990, %v989
        %v1038 = vpack.c.b16 %v992, %v991
        %v1039 = vpack.c.b16 %v994, %v993
        %v1040 = vpack.c.b16 %v996, %v995
        %v1041 = vpack.c.b16 %v998, %v997
        %v1042 = vpack.c.b16 %v1000, %v999
        %v1043 = vpack.c.b16 %v1002, %v1001
        %v1044 = vpack.c.b16 %v1004, %v1003
        %v1045 = vpack.c.b16 %v1006, %v1005
        %v1046 = vpack.c.b16 %v1008, %v1007
        %v1047 = vpack.c.b16 %v1010, %v1009
        %v1048 = vpack.c.b16 %v1012, %v1011
        %v1049 = vpack.c.b16 %v1014, %v1013
        %v1050 = vpack.c.b16 %v1016, %v1015
        %v1051 = vpack.c.b16 %v1018, %v1017
        %v1052 = vpack.c.b16 %v1020, %v1019
        %v1053 = vpack.c.b16 %v1022, %v1021
        %v1054 = vpack.c.b16 %v1024, %v1023
        %v1055 = vpack.c.b16 %v1026, %v1025
        %v1056 = vpack.c.b16 %v1028, %v1027
        %v1057 = vpack.c.b16 %v1030, %v1029
        %v1058 = vpack.c.b16 %v1032, %v1031
        %v1059 = vpack.c.b16 %v1034, %v1033
        %v1060 = vpack.c.b16 %v1036, %v1035
        %1085 = vmatprep.subr.bf16.mxu0 0
        %1086 = vmatpush1.bf16.msra.mxu0 %v1037
        %1087 = vmatprep.subr.bf16.mxu0 0
        %1088 = vmatpush1.bf16.msra.mxu0 %v1038
        %1089 = vmatprep.subr.bf16.mxu0 0
        %1090 = vmatpush1.bf16.msra.mxu0 %v1039
        %1091 = vmatprep.subr.bf16.mxu0 0
        %1092 = vmatpush1.bf16.msra.mxu0 %v1040
        %1093 = vmatprep.subr.bf16.mxu0 0
        %1094 = vmatpush1.bf16.msra.mxu0 %v1041
        %1095 = vmatprep.subr.bf16.mxu0 0
        %1096 = vmatpush1.bf16.msra.mxu0 %v1042
        %1097 = vmatprep.subr.bf16.mxu0 0
        %1098 = vmatpush1.bf16.msra.mxu0 %v1043
        %1099 = vmatprep.subr.bf16.mxu0 0
        %1100 = vmatpush1.bf16.msra.mxu0 %v1044
        %1101 = vmatprep.subr.bf16.mxu0 0
        %1102 = vmatpush1.bf16.msra.mxu0 %v1045
        %1103 = vmatprep.subr.bf16.mxu0 0
        %1104 = vmatpush1.bf16.msra.mxu0 %v1046
        %1105 = vmatprep.subr.bf16.mxu0 0
        %1106 = vmatpush1.bf16.msra.mxu0 %v1047
        %1107 = vmatprep.subr.bf16.mxu0 0
        %1108 = vmatpush1.bf16.msra.mxu0 %v1048
        %1109 = vmatprep.subr.bf16.mxu0 0
        %1110 = vmatpush1.bf16.msra.mxu0 %v1049
        %1111 = vmatprep.subr.bf16.mxu0 0
        %1112 = vmatpush1.bf16.msra.mxu0 %v1050
        %1113 = vmatprep.subr.bf16.mxu0 0
        %1114 = vmatpush1.bf16.msra.mxu0 %v1051
        %1115 = vmatprep.subr.bf16.mxu0 0
        %1116 = vmatpush1.bf16.msra.mxu0 %v1052
        %1117 = vmatprep.mubr.bf16.mxu0 %v870
        %1118 = vmatmul.mubr.bf16.gmra.mrb[0].mxu0 %v869
        %v1119 = vpop.f32.mrb[0].mxu0
        %v1120 = vadd.f32 0.0, %v1119
        %v1121 = vpop.f32.mrb[0].mxu0
        %v1122 = vpop.f32.mrb[0].mxu0
        %v1123 = vadd.f32 0.0, %v1122
        %v1124 = vpop.f32.mrb[0].mxu0
        %1125 = vmatprep.mubr.bf16.mxu0 %v873
        %1126 = vmatmul.mubr.bf16.gmra.mrb[0].mxu0 %v872
        %v1127 = vpop.f32.mrb[0].mxu0
        %v1128 = vadd.f32 0.0, %v1127
        %v1129 = vpop.f32.mrb[0].mxu0
        %v1130 = vpop.f32.mrb[0].mxu0
        %v1131 = vadd.f32 0.0, %v1130
        %v1132 = vpop.f32.mrb[0].mxu0
        %1133 = vmatprep.mubr.bf16.mxu0 %v876
        %1134 = vmatmul.mubr.bf16.gmra.mrb[0].mxu0 %v875
        %v1135 = vpop.f32.mrb[0].mxu0
        %v1136 = vadd.f32 0.0, %v1135
        %v1137 = vpop.f32.mrb[0].mxu0
        %v1138 = vpop.f32.mrb[0].mxu0
        %v1139 = vadd.f32 0.0, %v1138
        %v1140 = vpop.f32.mrb[0].mxu0
        %1141 = vmatprep.mubr.bf16.mxu0 %v879
        %1142 = vmatmul.mubr.bf16.gmra.mrb[0].mxu0 %v878
        %v1143 = vpop.f32.mrb[0].mxu0
        %v1144 = vadd.f32 0.0, %v1143
        %v1145 = vpop.f32.mrb[0].mxu0
        %v1146 = vpop.f32.mrb[0].mxu0
        %v1147 = vadd.f32 0.0, %v1146
        %v1148 = vpop.f32.mrb[0].mxu0
        %1149 = vmatprep.mubr.bf16.mxu0 %v882
        %1150 = vmatmul.mubr.bf16.gmra.mrb[0].mxu0 %v881
        %v1151 = vpop.f32.mrb[0].mxu0
        %v1152 = vadd.f32 0.0, %v1151
        %v1153 = vpop.f32.mrb[0].mxu0
        %v1154 = vpop.f32.mrb[0].mxu0
        %v1155 = vadd.f32 0.0, %v1154
        %v1156 = vpop.f32.mrb[0].mxu0
        %1157 = vmatprep.mubr.bf16.mxu0 %v885
        %1158 = vmatmul.mubr.bf16.gmra.mrb[0].mxu0 %v884
        %v1159 = vpop.f32.mrb[0].mxu0
        %v1160 = vadd.f32 0.0, %v1159
        %v1161 = vpop.f32.mrb[0].mxu0
        %v1162 = vpop.f32.mrb[0].mxu0
        %v1163 = vadd.f32 0.0, %v1162
        %v1164 = vpop.f32.mrb[0].mxu0
        %1165 = vmatprep.mubr.bf16.mxu0 %v888
        %1166 = vmatmul.mubr.bf16.gmra.mrb[0].mxu0 %v887
        %v1167 = vpop.f32.mrb[0].mxu0
        %v1168 = vadd.f32 0.0, %v1167
        %v1169 = vpop.f32.mrb[0].mxu0
        %v1170 = vpop.f32.mrb[0].mxu0
        %v1171 = vadd.f32 0.0, %v1170
        %v1172 = vpop.f32.mrb[0].mxu0
        %1173 = vmatprep.mubr.bf16.mxu0 %v891
        %1174 = vmatmul.mubr.bf16.gmra.mrb[0].mxu0 %v890
        %v1175 = vpop.f32.mrb[0].mxu0
        %v1176 = vadd.f32 0.0, %v1175
        %v1177 = vpop.f32.mrb[0].mxu0
        %v1178 = vpop.f32.mrb[0].mxu0
        %v1179 = vadd.f32 0.0, %v1178
        %v1180 = vpop.f32.mrb[0].mxu0
        %1181 = vdwg.mxu0
        %1182 = vmatprep.subr.bf16.mxu0 0
        %1183 = vmatpush1.bf16.msra.mxu0 %v1053
        %1184 = vmatprep.subr.bf16.mxu0 0
        %1185 = vmatpush1.bf16.msra.mxu0 %v1054
        %1186 = vmatprep.subr.bf16.mxu0 0
        %1187 = vmatpush1.bf16.msra.mxu0 %v1055
        %1188 = vmatprep.subr.bf16.mxu0 0
        %1189 = vmatpush1.bf16.msra.mxu0 %v1056
        %1190 = vmatprep.subr.bf16.mxu0 0
        %1191 = vmatpush1.bf16.msra.mxu0 %v1057
        %1192 = vmatprep.subr.bf16.mxu0 0
        %1193 = vmatpush1.bf16.msra.mxu0 %v1058
        %1194 = vmatprep.subr.bf16.mxu0 0
        %1195 = vmatpush1.bf16.msra.mxu0 %v1059
        %1196 = vmatprep.subr.bf16.mxu0 0
        %1197 = vmatpush1.bf16.msra.mxu0 %v1060
        %1198 = vmatprep.subr.bf16.mxu0 0
        %1199 = vmatpush1.bf16.msra.mxu0 0
        %1200 = vmatprep.subr.bf16.mxu0 0
        %1201 = vmatpush1.bf16.msra.mxu0 0
        %1202 = vmatprep.subr.bf16.mxu0 0
        %1203 = vmatpush1.bf16.msra.mxu0 0
        %1204 = vmatprep.subr.bf16.mxu0 0
        %1205 = vmatpush1.bf16.msra.mxu0 0
        %1206 = vmatprep.subr.bf16.mxu0 0
        %1207 = vmatpush1.bf16.msra.mxu0 0
        %1208 = vmatprep.subr.bf16.mxu0 0
        %1209 = vmatpush1.bf16.msra.mxu0 0
        %1210 = vmatprep.subr.bf16.mxu0 0
        %1211 = vmatpush1.bf16.msra.mxu0 0
        %1212 = vmatprep.subr.bf16.mxu0 0
        %1213 = vmatpush1.bf16.msra.mxu0 0
        %1214 = vmatprep.mubr.bf16.mxu0 0
        %1215 = vmatmul.mubr.bf16.gmra.mrb[0].mxu0 %v871
        %v1216 = vpop.f32.mrb[0].mxu0
        %v1217 = vadd.f32 %v1120, %v1216
        %v1218 = vpop.f32.mrb[0].mxu0
        %v1219 = vpop.f32.mrb[0].mxu0
        %v1220 = vadd.f32 %v1123, %v1219
        %v1221 = vpop.f32.mrb[0].mxu0
        %1222 = vmatprep.mubr.bf16.mxu0 0
        %1223 = vmatmul.mubr.bf16.gmra.mrb[0].mxu0 %v874
        %v1224 = vpop.f32.mrb[0].mxu0
        %v1225 = vadd.f32 %v1128, %v1224
        %v1226 = vpop.f32.mrb[0].mxu0
        %v1227 = vpop.f32.mrb[0].mxu0
        %v1228 = vadd.f32 %v1131, %v1227
        %v1229 = vpop.f32.mrb[0].mxu0
        %1230 = vmatprep.mubr.bf16.mxu0 0
        %1231 = vmatmul.mubr.bf16.gmra.mrb[0].mxu0 %v877
        %v1232 = vpop.f32.mrb[0].mxu0
        %v1233 = vadd.f32 %v1136, %v1232
        %v1234 = vpop.f32.mrb[0].mxu0
        %v1235 = vpop.f32.mrb[0].mxu0
        %v1236 = vadd.f32 %v1139, %v1235
        %v1237 = vpop.f32.mrb[0].mxu0
        %1238 = vmatprep.mubr.bf16.mxu0 0
        %1239 = vmatmul.mubr.bf16.gmra.mrb[0].mxu0 %v880
        %v1240 = vpop.f32.mrb[0].mxu0
        %v1241 = vadd.f32 %v1144, %v1240
        %v1242 = vpop.f32.mrb[0].mxu0
        %v1243 = vpop.f32.mrb[0].mxu0
        %v1244 = vadd.f32 %v1147, %v1243
        %v1245 = vpop.f32.mrb[0].mxu0
        %1246 = vmatprep.mubr.bf16.mxu0 0
        %1247 = vmatmul.mubr.bf16.gmra.mrb[0].mxu0 %v883
        %v1248 = vpop.f32.mrb[0].mxu0
        %v1249 = vadd.f32 %v1152, %v1248
        %v1250 = vpop.f32.mrb[0].mxu0
        %v1251 = vpop.f32.mrb[0].mxu0
        %v1252 = vadd.f32 %v1155, %v1251
        %v1253 = vpop.f32.mrb[0].mxu0
        %1254 = vmatprep.mubr.bf16.mxu0 0
        %1255 = vmatmul.mubr.bf16.gmra.mrb[0].mxu0 %v886
        %v1256 = vpop.f32.mrb[0].mxu0
        %v1257 = vadd.f32 %v1160, %v1256
        %v1258 = vpop.f32.mrb[0].mxu0
        %v1259 = vpop.f32.mrb[0].mxu0
        %v1260 = vadd.f32 %v1163, %v1259
        %v1261 = vpop.f32.mrb[0].mxu0
        %1262 = vmatprep.mubr.bf16.mxu0 0
        %1263 = vmatmul.mubr.bf16.gmra.mrb[0].mxu0 %v889
        %v1264 = vpop.f32.mrb[0].mxu0
        %v1265 = vadd.f32 %v1168, %v1264
        %v1266 = vpop.f32.mrb[0].mxu0
        %v1267 = vpop.f32.mrb[0].mxu0
        %v1268 = vadd.f32 %v1171, %v1267
        %v1269 = vpop.f32.mrb[0].mxu0
        %1270 = vmatprep.mubr.bf16.mxu0 0
        %1271 = vmatmul.mubr.bf16.gmra.mrb[0].mxu0 %v892
        %v1272 = vpop.f32.mrb[0].mxu0
        %v1273 = vadd.f32 %v1176, %v1272
        %v1274 = vpop.f32.mrb[0].mxu0
        %v1275 = vpop.f32.mrb[0].mxu0
        %v1276 = vadd.f32 %v1179, %v1275
        %v1277 = vpop.f32.mrb[0].mxu0
        %1278 = vdwg.mxu0
        %v1327 = vunpack.c.l.b16 %v757
        %v1328 = vunpack.c.l.b16 %v758
        %v1329 = vunpack.c.l.b16 %v759
        %v1330 = vunpack.c.l.b16 %v760
        %v1331 = vunpack.c.l.b16 %v761
        %v1332 = vunpack.c.l.b16 %v762
        %v1333 = vunpack.c.l.b16 %v763
        %v1334 = vunpack.c.l.b16 %v764
        %v1335 = vunpack.c.l.b16 %v765
        %v1336 = vunpack.c.l.b16 %v766
        %v1337 = vunpack.c.l.b16 %v767
        %v1338 = vunpack.c.l.b16 %v768
        %v1339 = vunpack.c.l.b16 %v769
        %v1340 = vunpack.c.l.b16 %v770
        %v1341 = vunpack.c.l.b16 %v771
        %v1342 = vunpack.c.l.b16 %v772
        %v1343 = vunpack.c.l.b16 %v773
        %v1344 = vunpack.c.l.b16 %v774
        %v1345 = vunpack.c.l.b16 %v775
        %v1346 = vunpack.c.l.b16 %v776
        %v1347 = vunpack.c.l.b16 %v777
        %v1348 = vunpack.c.l.b16 %v778
        %v1349 = vunpack.c.l.b16 %v779
        %v1350 = vunpack.c.l.b16 %v780
        %v1351 = vunpack.c.l.b16 %v781
        %v1352 = vunpack.c.l.b16 %v782
        %v1353 = vunpack.c.l.b16 %v783
        %v1354 = vunpack.c.l.b16 %v784
        %v1355 = vunpack.c.l.b16 %v785
        %v1356 = vunpack.c.l.b16 %v786
        %v1357 = vunpack.c.l.b16 %v787
        %v1358 = vunpack.c.l.b16 %v788
        %v1359 = vunpack.c.l.b16 %v789
        %v1360 = vunpack.c.l.b16 %v790
        %v1361 = vunpack.c.l.b16 %v791
        %v1362 = vunpack.c.l.b16 %v792
        %v1363 = vunpack.c.l.b16 %v793
        %v1364 = vunpack.c.l.b16 %v794
        %v1365 = vunpack.c.l.b16 %v795
        %v1366 = vunpack.c.l.b16 %v796
        %v1367 = vunpack.c.l.b16 %v797
        %v1368 = vunpack.c.l.b16 %v798
        %v1369 = vunpack.c.l.b16 %v799
        %v1370 = vunpack.c.l.b16 %v800
        %v1371 = vunpack.c.l.b16 %v801
        %v1372 = vunpack.c.l.b16 %v802
        %v1373 = vunpack.c.l.b16 %v803
        %v1374 = vunpack.c.l.b16 %v804
        %v1375 = vpack.c.b16 %v1328, %v1327
        %v1376 = vpack.c.b16 %v1330, %v1329
        %v1377 = vpack.c.b16 %v1332, %v1331
        %v1378 = vpack.c.b16 %v1334, %v1333
        %v1379 = vpack.c.b16 %v1336, %v1335
        %v1380 = vpack.c.b16 %v1338, %v1337
        %v1381 = vpack.c.b16 %v1340, %v1339
        %v1382 = vpack.c.b16 %v1342, %v1341
        %v1383 = vpack.c.b16 %v1344, %v1343
        %v1384 = vpack.c.b16 %v1346, %v1345
        %v1385 = vpack.c.b16 %v1348, %v1347
        %v1386 = vpack.c.b16 %v1350, %v1349
        %v1387 = vpack.c.b16 %v1352, %v1351
        %v1388 = vpack.c.b16 %v1354, %v1353
        %v1389 = vpack.c.b16 %v1356, %v1355
        %v1390 = vpack.c.b16 %v1358, %v1357
        %v1391 = vpack.c.b16 %v1360, %v1359
        %v1392 = vpack.c.b16 %v1362, %v1361
        %v1393 = vpack.c.b16 %v1364, %v1363
        %v1394 = vpack.c.b16 %v1366, %v1365
        %v1395 = vpack.c.b16 %v1368, %v1367
        %v1396 = vpack.c.b16 %v1370, %v1369
        %v1397 = vpack.c.b16 %v1372, %v1371
        %v1398 = vpack.c.b16 %v1374, %v1373
        %1423 = vmatprep.subr.bf16.mxu0 0
        %1424 = vmatpush1.bf16.msra.mxu0 %v1375
        %1425 = vmatprep.subr.bf16.mxu0 0
        %1426 = vmatpush1.bf16.msra.mxu0 %v1376
        %1427 = vmatprep.subr.bf16.mxu0 0
        %1428 = vmatpush1.bf16.msra.mxu0 %v1377
        %1429 = vmatprep.subr.bf16.mxu0 0
        %1430 = vmatpush1.bf16.msra.mxu0 %v1378
        %1431 = vmatprep.subr.bf16.mxu0 0
        %1432 = vmatpush1.bf16.msra.mxu0 %v1379
        %1433 = vmatprep.subr.bf16.mxu0 0
        %1434 = vmatpush1.bf16.msra.mxu0 %v1380
        %1435 = vmatprep.subr.bf16.mxu0 0
        %1436 = vmatpush1.bf16.msra.mxu0 %v1381
        %1437 = vmatprep.subr.bf16.mxu0 0
        %1438 = vmatpush1.bf16.msra.mxu0 %v1382
        %1439 = vmatprep.subr.bf16.mxu0 0
        %1440 = vmatpush1.bf16.msra.mxu0 %v1383
        %1441 = vmatprep.subr.bf16.mxu0 0
        %1442 = vmatpush1.bf16.msra.mxu0 %v1384
        %1443 = vmatprep.subr.bf16.mxu0 0
        %1444 = vmatpush1.bf16.msra.mxu0 %v1385
        %1445 = vmatprep.subr.bf16.mxu0 0
        %1446 = vmatpush1.bf16.msra.mxu0 %v1386
        %1447 = vmatprep.subr.bf16.mxu0 0
        %1448 = vmatpush1.bf16.msra.mxu0 %v1387
        %1449 = vmatprep.subr.bf16.mxu0 0
        %1450 = vmatpush1.bf16.msra.mxu0 %v1388
        %1451 = vmatprep.subr.bf16.mxu0 0
        %1452 = vmatpush1.bf16.msra.mxu0 %v1389
        %1453 = vmatprep.subr.bf16.mxu0 0
        %1454 = vmatpush1.bf16.msra.mxu0 %v1390
        %1455 = vmatprep.mubr.bf16.mxu0 %v734
        %1456 = vmatmul.mubr.bf16.gmra.mrb[0].mxu0 %v733
        %v1457 = vpop.f32.mrb[0].mxu0
        %v1458 = vadd.f32 %v1217, %v1457
        %v1459 = vpop.f32.mrb[0].mxu0
        %v1460 = vpop.f32.mrb[0].mxu0
        %v1461 = vadd.f32 %v1220, %v1460
        %v1462 = vpop.f32.mrb[0].mxu0
        %1463 = vmatprep.mubr.bf16.mxu0 %v737
        %1464 = vmatmul.mubr.bf16.gmra.mrb[0].mxu0 %v736
        %v1465 = vpop.f32.mrb[0].mxu0
        %v1466 = vadd.f32 %v1225, %v1465
        %v1467 = vpop.f32.mrb[0].mxu0
        %v1468 = vpop.f32.mrb[0].mxu0
        %v1469 = vadd.f32 %v1228, %v1468
        %v1470 = vpop.f32.mrb[0].mxu0
        %1471 = vmatprep.mubr.bf16.mxu0 %v740
        %1472 = vmatmul.mubr.bf16.gmra.mrb[0].mxu0 %v739
        %v1473 = vpop.f32.mrb[0].mxu0
        %v1474 = vadd.f32 %v1233, %v1473
        %v1475 = vpop.f32.mrb[0].mxu0
        %v1476 = vpop.f32.mrb[0].mxu0
        %v1477 = vadd.f32 %v1236, %v1476
        %v1478 = vpop.f32.mrb[0].mxu0
        %1479 = vmatprep.mubr.bf16.mxu0 %v743
        %1480 = vmatmul.mubr.bf16.gmra.mrb[0].mxu0 %v742
        %v1481 = vpop.f32.mrb[0].mxu0
        %v1482 = vadd.f32 %v1241, %v1481
        %v1483 = vpop.f32.mrb[0].mxu0
        %v1484 = vpop.f32.mrb[0].mxu0
        %v1485 = vadd.f32 %v1244, %v1484
        %v1486 = vpop.f32.mrb[0].mxu0
        %1487 = vmatprep.mubr.bf16.mxu0 %v746
        %1488 = vmatmul.mubr.bf16.gmra.mrb[0].mxu0 %v745
        %v1489 = vpop.f32.mrb[0].mxu0
        %v1490 = vadd.f32 %v1249, %v1489
        %v1491 = vpop.f32.mrb[0].mxu0
        %v1492 = vpop.f32.mrb[0].mxu0
        %v1493 = vadd.f32 %v1252, %v1492
        %v1494 = vpop.f32.mrb[0].mxu0
        %1495 = vmatprep.mubr.bf16.mxu0 %v749
        %1496 = vmatmul.mubr.bf16.gmra.mrb[0].mxu0 %v748
        %v1497 = vpop.f32.mrb[0].mxu0
        %v1498 = vadd.f32 %v1257, %v1497
        %v1499 = vpop.f32.mrb[0].mxu0
        %v1500 = vpop.f32.mrb[0].mxu0
        %v1501 = vadd.f32 %v1260, %v1500
        %v1502 = vpop.f32.mrb[0].mxu0
        %1503 = vmatprep.mubr.bf16.mxu0 %v752
        %1504 = vmatmul.mubr.bf16.gmra.mrb[0].mxu0 %v751
        %v1505 = vpop.f32.mrb[0].mxu0
        %v1506 = vadd.f32 %v1265, %v1505
        %v1507 = vpop.f32.mrb[0].mxu0
        %v1508 = vpop.f32.mrb[0].mxu0
        %v1509 = vadd.f32 %v1268, %v1508
        %v1510 = vpop.f32.mrb[0].mxu0
        %1511 = vmatprep.mubr.bf16.mxu0 %v755
        %1512 = vmatmul.mubr.bf16.gmra.mrb[0].mxu0 %v754
        %v1513 = vpop.f32.mrb[0].mxu0
        %v1514 = vadd.f32 %v1273, %v1513
        %v1515 = vpop.f32.mrb[0].mxu0
        %v1516 = vpop.f32.mrb[0].mxu0
        %v1517 = vadd.f32 %v1276, %v1516
        %v1518 = vpop.f32.mrb[0].mxu0
        %1519 = vdwg.mxu0
        %1520 = vmatprep.subr.bf16.mxu0 0
        %1521 = vmatpush1.bf16.msra.mxu0 %v1391
        %1522 = vmatprep.subr.bf16.mxu0 0
        %1523 = vmatpush1.bf16.msra.mxu0 %v1392
        %1524 = vmatprep.subr.bf16.mxu0 0
        %1525 = vmatpush1.bf16.msra.mxu0 %v1393
        %1526 = vmatprep.subr.bf16.mxu0 0
        %1527 = vmatpush1.bf16.msra.mxu0 %v1394
        %1528 = vmatprep.subr.bf16.mxu0 0
        %1529 = vmatpush1.bf16.msra.mxu0 %v1395
        %1530 = vmatprep.subr.bf16.mxu0 0
        %1531 = vmatpush1.bf16.msra.mxu0 %v1396
        %1532 = vmatprep.subr.bf16.mxu0 0
        %1533 = vmatpush1.bf16.msra.mxu0 %v1397
        %1534 = vmatprep.subr.bf16.mxu0 0
        %1535 = vmatpush1.bf16.msra.mxu0 %v1398
        %1536 = vmatprep.subr.bf16.mxu0 0
        %1537 = vmatpush1.bf16.msra.mxu0 0
        %1538 = vmatprep.subr.bf16.mxu0 0
        %1539 = vmatpush1.bf16.msra.mxu0 0
        %1540 = vmatprep.subr.bf16.mxu0 0
        %1541 = vmatpush1.bf16.msra.mxu0 0
        %1542 = vmatprep.subr.bf16.mxu0 0
        %1543 = vmatpush1.bf16.msra.mxu0 0
        %1544 = vmatprep.subr.bf16.mxu0 0
        %1545 = vmatpush1.bf16.msra.mxu0 0
        %1546 = vmatprep.subr.bf16.mxu0 0
        %1547 = vmatpush1.bf16.msra.mxu0 0
        %1548 = vmatprep.subr.bf16.mxu0 0
        %1549 = vmatpush1.bf16.msra.mxu0 0
        %1550 = vmatprep.subr.bf16.mxu0 0
        %1551 = vmatpush1.bf16.msra.mxu0 0
        %1552 = vmatprep.mubr.bf16.mxu0 0
        %1553 = vmatmul.mubr.bf16.gmra.mrb[0].mxu0 %v735
        %v1554 = vpop.f32.mrb[0].mxu0
        %v1555 = vadd.f32 %v1458, %v1554
        %v1556 = vpop.f32.mrb[0].mxu0
        %v1557 = vpop.f32.mrb[0].mxu0
        %v1558 = vadd.f32 %v1461, %v1557
        %v1559 = vpop.f32.mrb[0].mxu0
        %1560 = vmatprep.mubr.bf16.mxu0 0
        %1561 = vmatmul.mubr.bf16.gmra.mrb[0].mxu0 %v738
        %v1562 = vpop.f32.mrb[0].mxu0
        %v1563 = vadd.f32 %v1466, %v1562
        %v1564 = vpop.f32.mrb[0].mxu0
        %v1565 = vpop.f32.mrb[0].mxu0
        %v1566 = vadd.f32 %v1469, %v1565
        %v1567 = vpop.f32.mrb[0].mxu0
        %1568 = vmatprep.mubr.bf16.mxu0 0
        %1569 = vmatmul.mubr.bf16.gmra.mrb[0].mxu0 %v741
        %v1570 = vpop.f32.mrb[0].mxu0
        %v1571 = vadd.f32 %v1474, %v1570
        %v1572 = vpop.f32.mrb[0].mxu0
        %v1573 = vpop.f32.mrb[0].mxu0
        %v1574 = vadd.f32 %v1477, %v1573
        %v1575 = vpop.f32.mrb[0].mxu0
        %1576 = vmatprep.mubr.bf16.mxu0 0
        %1577 = vmatmul.mubr.bf16.gmra.mrb[0].mxu0 %v744
        %v1578 = vpop.f32.mrb[0].mxu0
        %v1579 = vadd.f32 %v1482, %v1578
        %v1580 = vpop.f32.mrb[0].mxu0
        %v1581 = vpop.f32.mrb[0].mxu0
        %v1582 = vadd.f32 %v1485, %v1581
        %v1583 = vpop.f32.mrb[0].mxu0
        %1584 = vmatprep.mubr.bf16.mxu0 0
        %1585 = vmatmul.mubr.bf16.gmra.mrb[0].mxu0 %v747
        %v1586 = vpop.f32.mrb[0].mxu0
        %v1587 = vadd.f32 %v1490, %v1586
        %v1588 = vpop.f32.mrb[0].mxu0
        %v1589 = vpop.f32.mrb[0].mxu0
        %v1590 = vadd.f32 %v1493, %v1589
        %v1591 = vpop.f32.mrb[0].mxu0
        %1592 = vmatprep.mubr.bf16.mxu0 0
        %1593 = vmatmul.mubr.bf16.gmra.mrb[0].mxu0 %v750
        %v1594 = vpop.f32.mrb[0].mxu0
        %v1595 = vadd.f32 %v1498, %v1594
        %v1596 = vpop.f32.mrb[0].mxu0
        %v1597 = vpop.f32.mrb[0].mxu0
        %v1598 = vadd.f32 %v1501, %v1597
        %v1599 = vpop.f32.mrb[0].mxu0
        %1600 = vmatprep.mubr.bf16.mxu0 0
        %1601 = vmatmul.mubr.bf16.gmra.mrb[0].mxu0 %v753
        %v1602 = vpop.f32.mrb[0].mxu0
        %v1603 = vadd.f32 %v1506, %v1602
        %v1604 = vpop.f32.mrb[0].mxu0
        %v1605 = vpop.f32.mrb[0].mxu0
        %v1606 = vadd.f32 %v1509, %v1605
        %v1607 = vpop.f32.mrb[0].mxu0
        %1608 = vmatprep.mubr.bf16.mxu0 0
        %1609 = vmatmul.mubr.bf16.gmra.mrb[0].mxu0 %v756
        %v1610 = vpop.f32.mrb[0].mxu0
        %v1611 = vadd.f32 %v1514, %v1610
        %v1612 = vpop.f32.mrb[0].mxu0
        %v1613 = vpop.f32.mrb[0].mxu0
        %v1614 = vadd.f32 %v1517, %v1613
        %v1615 = vpop.f32.mrb[0].mxu0
        %1616 = vdwg.mxu0
        %v1617 = vld [vmem:[%s6] sm:$0x1]
        %v1619 = vlaneseq
        %v1620 = vshrl.u32 %v1619, 7
        %v1621 = vsub.s32 0, %v1620
        %v1622 = vrot.slane %v1617, %v1621
        %v1624 = vadd.f32 %v1555, %v1622
        %v1625 = vadd.f32 %v1558, %v1622
        %v1626 = vadd.f32 %v1563, %v1622
        %v1627 = vadd.f32 %v1566, %v1622
        %v1628 = vadd.f32 %v1571, %v1622
        %v1629 = vadd.f32 %v1574, %v1622
        %v1630 = vadd.f32 %v1579, %v1622
        %v1631 = vadd.f32 %v1582, %v1622
        %v1632 = vadd.f32 %v1587, %v1622
        %v1633 = vadd.f32 %v1590, %v1622
        %v1634 = vadd.f32 %v1595, %v1622
        %v1635 = vadd.f32 %v1598, %v1622
        %v1636 = vadd.f32 %v1603, %v1622
        %v1637 = vadd.f32 %v1606, %v1622
        %v1638 = vadd.f32 %v1611, %v1622
        %v1639 = vadd.f32 %v1614, %v1622
        %v1640 = vld [vmem:[%s5] sm:$0x1]
        %1642 = vset.pattern.permute.xlu0 0
        %1643 = vperm.xlu0 %1642, %v573
        %v1644 = vpop.permute.xlu0 %1643
        %1647 = vset.pattern.permute.xlu0 0
        %1648 = vperm.xlu0 %1647, %v574
        %v1649 = vpop.permute.xlu0 %1648
        %1652 = vset.pattern.permute.xlu0 0
        %1653 = vperm.xlu0 %1652, %v575
        %v1654 = vpop.permute.xlu0 %1653
        %1657 = vset.pattern.permute.xlu0 0
        %1658 = vperm.xlu0 %1657, %v576
        %v1659 = vpop.permute.xlu0 %1658
        %1662 = vset.pattern.permute.xlu0 0
        %1663 = vperm.xlu0 %1662, %v577
        %v1664 = vpop.permute.xlu0 %1663
        %1667 = vset.pattern.permute.xlu0 0
        %1668 = vperm.xlu0 %1667, %v578
        %v1669 = vpop.permute.xlu0 %1668
        %1672 = vset.pattern.permute.xlu0 0
        %1673 = vperm.xlu0 %1672, %v579
        %v1674 = vpop.permute.xlu0 %1673
        %1677 = vset.pattern.permute.xlu0 0
        %1678 = vperm.xlu0 %1677, %v580
        %v1679 = vpop.permute.xlu0 %1678
        %1682 = vset.pattern.permute.xlu0 0
        %1683 = vperm.xlu0 %1682, %v581
        %v1684 = vpop.permute.xlu0 %1683
        %1687 = vset.pattern.permute.xlu0 0
        %1688 = vperm.xlu0 %1687, %v582
        %v1689 = vpop.permute.xlu0 %1688
        %1692 = vset.pattern.permute.xlu0 0
        %1693 = vperm.xlu0 %1692, %v583
        %v1694 = vpop.permute.xlu0 %1693
        %1697 = vset.pattern.permute.xlu0 0
        %1698 = vperm.xlu0 %1697, %v584
        %v1699 = vpop.permute.xlu0 %1698
        %1702 = vset.pattern.permute.xlu0 0
        %1703 = vperm.xlu0 %1702, %v585
        %v1704 = vpop.permute.xlu0 %1703
        %1707 = vset.pattern.permute.xlu0 0
        %1708 = vperm.xlu0 %1707, %v586
        %v1709 = vpop.permute.xlu0 %1708
        %1712 = vset.pattern.permute.xlu0 0
        %1713 = vperm.xlu0 %1712, %v587
        %v1714 = vpop.permute.xlu0 %1713
        %1717 = vset.pattern.permute.xlu0 0
        %1718 = vperm.xlu0 %1717, %v588
        %v1719 = vpop.permute.xlu0 %1718
        %v1721 = vlaneseq
        %v1722 = vshrl.u32 %v1721, 7
        %v1723 = vsub.s32 0, %v1722
        %v1724 = vrot.slane %v1640, %v1723
        %v1725 = vmul.f32 %v1644, %v1724
        %v1726 = vmul.f32 %v1649, %v1724
        %v1727 = vmul.f32 %v1654, %v1724
        %v1728 = vmul.f32 %v1659, %v1724
        %v1729 = vmul.f32 %v1664, %v1724
        %v1730 = vmul.f32 %v1669, %v1724
        %v1731 = vmul.f32 %v1674, %v1724
        %v1732 = vmul.f32 %v1679, %v1724
        %v1733 = vmul.f32 %v1684, %v1724
        %v1734 = vmul.f32 %v1689, %v1724
        %v1735 = vmul.f32 %v1694, %v1724
        %v1736 = vmul.f32 %v1699, %v1724
        %v1737 = vmul.f32 %v1704, %v1724
        %v1738 = vmul.f32 %v1709, %v1724
        %v1739 = vmul.f32 %v1714, %v1724
        %v1740 = vmul.f32 %v1719, %v1724
        %v1741 = vadd.f32 %v1624, %v1725
        %v1742 = vadd.f32 %v1625, %v1726
        %v1743 = vadd.f32 %v1626, %v1727
        %v1744 = vadd.f32 %v1627, %v1728
        %v1745 = vadd.f32 %v1628, %v1729
        %v1746 = vadd.f32 %v1629, %v1730
        %v1747 = vadd.f32 %v1630, %v1731
        %v1748 = vadd.f32 %v1631, %v1732
        %v1749 = vadd.f32 %v1632, %v1733
        %v1750 = vadd.f32 %v1633, %v1734
        %v1751 = vadd.f32 %v1634, %v1735
        %v1752 = vadd.f32 %v1635, %v1736
        %v1753 = vadd.f32 %v1636, %v1737
        %v1754 = vadd.f32 %v1637, %v1738
        %v1755 = vadd.f32 %v1638, %v1739
        %v1756 = vadd.f32 %v1639, %v1740
        %v1757 = vld [vmem:[%s5 + $0x1] sm:$0x1]
        %1758 = vset.pattern.permute.xlu0 1
        %1759 = vperm.xlu0 %1758, %v573
        %v1760 = vpop.permute.xlu0 %1759
        %1762 = vset.pattern.permute.xlu0 1
        %1763 = vperm.xlu0 %1762, %v574
        %v1764 = vpop.permute.xlu0 %1763
        %1766 = vset.pattern.permute.xlu0 1
        %1767 = vperm.xlu0 %1766, %v575
        %v1768 = vpop.permute.xlu0 %1767
        %1770 = vset.pattern.permute.xlu0 1
        %1771 = vperm.xlu0 %1770, %v576
        %v1772 = vpop.permute.xlu0 %1771
        %1774 = vset.pattern.permute.xlu0 1
        %1775 = vperm.xlu0 %1774, %v577
        %v1776 = vpop.permute.xlu0 %1775
        %1778 = vset.pattern.permute.xlu0 1
        %1779 = vperm.xlu0 %1778, %v578
        %v1780 = vpop.permute.xlu0 %1779
        %1782 = vset.pattern.permute.xlu0 1
        %1783 = vperm.xlu0 %1782, %v579
        %v1784 = vpop.permute.xlu0 %1783
        %1786 = vset.pattern.permute.xlu0 1
        %1787 = vperm.xlu0 %1786, %v580
        %v1788 = vpop.permute.xlu0 %1787
        %1790 = vset.pattern.permute.xlu0 1
        %1791 = vperm.xlu0 %1790, %v581
        %v1792 = vpop.permute.xlu0 %1791
        %1794 = vset.pattern.permute.xlu0 1
        %1795 = vperm.xlu0 %1794, %v582
        %v1796 = vpop.permute.xlu0 %1795
        %1798 = vset.pattern.permute.xlu0 1
        %1799 = vperm.xlu0 %1798, %v583
        %v1800 = vpop.permute.xlu0 %1799
        %1802 = vset.pattern.permute.xlu0 1
        %1803 = vperm.xlu0 %1802, %v584
        %v1804 = vpop.permute.xlu0 %1803
        %1806 = vset.pattern.permute.xlu0 1
        %1807 = vperm.xlu0 %1806, %v585
        %v1808 = vpop.permute.xlu0 %1807
        %1810 = vset.pattern.permute.xlu0 1
        %1811 = vperm.xlu0 %1810, %v586
        %v1812 = vpop.permute.xlu0 %1811
        %1814 = vset.pattern.permute.xlu0 1
        %1815 = vperm.xlu0 %1814, %v587
        %v1816 = vpop.permute.xlu0 %1815
        %1818 = vset.pattern.permute.xlu0 1
        %1819 = vperm.xlu0 %1818, %v588
        %v1820 = vpop.permute.xlu0 %1819
        %v1822 = vlaneseq
        %v1823 = vshrl.u32 %v1822, 7
        %v1824 = vsub.s32 0, %v1823
        %v1825 = vrot.slane %v1757, %v1824
        %v1826 = vmul.f32 %v1760, %v1825
        %v1827 = vmul.f32 %v1764, %v1825
        %v1828 = vmul.f32 %v1768, %v1825
        %v1829 = vmul.f32 %v1772, %v1825
        %v1830 = vmul.f32 %v1776, %v1825
        %v1831 = vmul.f32 %v1780, %v1825
        %v1832 = vmul.f32 %v1784, %v1825
        %v1833 = vmul.f32 %v1788, %v1825
        %v1834 = vmul.f32 %v1792, %v1825
        %v1835 = vmul.f32 %v1796, %v1825
        %v1836 = vmul.f32 %v1800, %v1825
        %v1837 = vmul.f32 %v1804, %v1825
        %v1838 = vmul.f32 %v1808, %v1825
        %v1839 = vmul.f32 %v1812, %v1825
        %v1840 = vmul.f32 %v1816, %v1825
        %v1841 = vmul.f32 %v1820, %v1825
        %v1842 = vadd.f32 %v1741, %v1826
        %v1843 = vadd.f32 %v1742, %v1827
        %v1844 = vadd.f32 %v1743, %v1828
        %v1845 = vadd.f32 %v1744, %v1829
        %v1846 = vadd.f32 %v1745, %v1830
        %v1847 = vadd.f32 %v1746, %v1831
        %v1848 = vadd.f32 %v1747, %v1832
        %v1849 = vadd.f32 %v1748, %v1833
        %v1850 = vadd.f32 %v1749, %v1834
        %v1851 = vadd.f32 %v1750, %v1835
        %v1852 = vadd.f32 %v1751, %v1836
        %v1853 = vadd.f32 %v1752, %v1837
        %v1854 = vadd.f32 %v1753, %v1838
        %v1855 = vadd.f32 %v1754, %v1839
        %v1856 = vadd.f32 %v1755, %v1840
        %v1857 = vadd.f32 %v1756, %v1841
        %v1858 = vld [vmem:[%s5 + $0x2] sm:$0x1]
        %v1859 = vlaneseq
        %v1860 = vshrl.u32 %v1859, 7
        %v1861 = vsub.s32 0, %v1860
        %v1862 = vrot.slane %v1858, %v1861
        %v1863 = vmul.f32 %v606, %v1862
        %v1864 = vmul.f32 %v608, %v1862
        %v1865 = vmul.f32 %v610, %v1862
        %v1866 = vmul.f32 %v612, %v1862
        %v1867 = vmul.f32 %v614, %v1862
        %v1868 = vmul.f32 %v616, %v1862
        %v1869 = vmul.f32 %v618, %v1862
        %v1870 = vmul.f32 %v620, %v1862
        %v1871 = vmul.f32 %v622, %v1862
        %v1872 = vmul.f32 %v624, %v1862
        %v1873 = vmul.f32 %v626, %v1862
        %v1874 = vmul.f32 %v628, %v1862
        %v1875 = vmul.f32 %v630, %v1862
        %v1876 = vmul.f32 %v632, %v1862
        %v1877 = vmul.f32 %v634, %v1862
        %v1878 = vmul.f32 %v636, %v1862
        %v1879 = vadd.f32 %v1842, %v1863
        %v1880 = vadd.f32 %v1843, %v1864
        %v1881 = vadd.f32 %v1844, %v1865
        %v1882 = vadd.f32 %v1845, %v1866
        %v1883 = vadd.f32 %v1846, %v1867
        %v1884 = vadd.f32 %v1847, %v1868
        %v1885 = vadd.f32 %v1848, %v1869
        %v1886 = vadd.f32 %v1849, %v1870
        %v1887 = vadd.f32 %v1850, %v1871
        %v1888 = vadd.f32 %v1851, %v1872
        %v1889 = vadd.f32 %v1852, %v1873
        %v1890 = vadd.f32 %v1853, %v1874
        %v1891 = vadd.f32 %v1854, %v1875
        %v1892 = vadd.f32 %v1855, %v1876
        %v1893 = vadd.f32 %v1856, %v1877
        %v1894 = vadd.f32 %v1857, %v1878
        %v1895 = vld [vmem:[%s5 + $0x3] sm:$0x1]
        %v1896 = vlaneseq
        %v1897 = vshrl.u32 %v1896, 7
        %v1898 = vsub.s32 0, %v1897
        %v1899 = vrot.slane %v1895, %v1898
        %v1900 = vmul.f32 %v654, %v1899
        %v1901 = vmul.f32 %v656, %v1899
        %v1902 = vmul.f32 %v658, %v1899
        %v1903 = vmul.f32 %v660, %v1899
        %v1904 = vmul.f32 %v662, %v1899
        %v1905 = vmul.f32 %v664, %v1899
        %v1906 = vmul.f32 %v666, %v1899
        %v1907 = vmul.f32 %v668, %v1899
        %v1908 = vmul.f32 %v670, %v1899
        %v1909 = vmul.f32 %v672, %v1899
        %v1910 = vmul.f32 %v674, %v1899
        %v1911 = vmul.f32 %v676, %v1899
        %v1912 = vmul.f32 %v678, %v1899
        %v1913 = vmul.f32 %v680, %v1899
        %v1914 = vmul.f32 %v682, %v1899
        %v1915 = vmul.f32 %v684, %v1899
        %v1916 = vadd.f32 %v1879, %v1900
        %v1917 = vadd.f32 %v1880, %v1901
        %v1918 = vadd.f32 %v1881, %v1902
        %v1919 = vadd.f32 %v1882, %v1903
        %v1920 = vadd.f32 %v1883, %v1904
        %v1921 = vadd.f32 %v1884, %v1905
        %v1922 = vadd.f32 %v1885, %v1906
        %v1923 = vadd.f32 %v1886, %v1907
        %v1924 = vadd.f32 %v1887, %v1908
        %v1925 = vadd.f32 %v1888, %v1909
        %v1926 = vadd.f32 %v1889, %v1910
        %v1927 = vadd.f32 %v1890, %v1911
        %v1928 = vadd.f32 %v1891, %v1912
        %v1929 = vadd.f32 %v1892, %v1913
        %v1930 = vadd.f32 %v1893, %v1914
        %v1931 = vadd.f32 %v1894, %v1915
        %v1932 = vmax.f32 %v1916, 0.0
        %v1933 = vmax.f32 %v1917, 0.0
        %v1934 = vmax.f32 %v1918, 0.0
        %v1935 = vmax.f32 %v1919, 0.0
        %v1936 = vmax.f32 %v1920, 0.0
        %v1937 = vmax.f32 %v1921, 0.0
        %v1938 = vmax.f32 %v1922, 0.0
        %v1939 = vmax.f32 %v1923, 0.0
        %v1940 = vmax.f32 %v1924, 0.0
        %v1941 = vmax.f32 %v1925, 0.0
        %v1942 = vmax.f32 %v1926, 0.0
        %v1943 = vmax.f32 %v1927, 0.0
        %v1944 = vmax.f32 %v1928, 0.0
        %v1945 = vmax.f32 %v1929, 0.0
        %v1946 = vmax.f32 %v1930, 0.0
        %v1947 = vmax.f32 %v1931, 0.0
        %v1948 = vpack.c.bf16 %v1933, %v1932
        %v1949 = vpack.c.bf16 %v1935, %v1934
        %v1950 = vpack.c.bf16 %v1937, %v1936
        %v1951 = vpack.c.bf16 %v1939, %v1938
        %v1952 = vpack.c.bf16 %v1941, %v1940
        %v1953 = vpack.c.bf16 %v1943, %v1942
        %v1954 = vpack.c.bf16 %v1945, %v1944
        %v1955 = vpack.c.bf16 %v1947, %v1946
        %v1956 = vld [vmem:[#allocation9] sm:$0xf]
        %v1957 = vld [vmem:[#allocation9 + $0x4] sm:$0xf]
        %v1958 = vld [vmem:[#allocation9 + $0x8] sm:$0xf]
        %v1959 = vld [vmem:[#allocation9 + $0xc] sm:$0xf]
        %v1960 = vld [vmem:[#allocation9 + $0x10] sm:$0xf]
        %v1961 = vld [vmem:[#allocation9 + $0x14] sm:$0xf]
        %v1962 = vld [vmem:[#allocation9 + $0x18] sm:$0xf]
        %v1963 = vld [vmem:[#allocation9 + $0x1c] sm:$0xf]
        %v1964 = vld [vmem:[#allocation9 + $0x20] sm:$0xf]
        %v1965 = vld [vmem:[#allocation9 + $0x24] sm:$0xf]
        %v1966 = vld [vmem:[#allocation9 + $0x28] sm:$0xf]
        %v1967 = vld [vmem:[#allocation9 + $0x2c] sm:$0xf]
        %v1968 = vld [vmem:[#allocation9 + $0x30] sm:$0xf]
        %v1969 = vld [vmem:[#allocation9 + $0x34] sm:$0xf]
        %v1970 = vld [vmem:[#allocation9 + $0x38] sm:$0xf]
        %v1971 = vld [vmem:[#allocation9 + $0x3c] sm:$0xf]
        %v1972 = vld [vmem:[%s8] sm:$0x1]
        %v1974 = vlaneseq
        %v1975 = vshrl.u32 %v1974, 7
        %v1976 = vsub.s32 0, %v1975
        %v1977 = vrot.slane %v1972, %v1976
        %v1995 = vunpack.c.l.b16 %v1956
        %v1996 = vunpack.c.l.b16 %v1957
        %v1997 = vunpack.c.l.b16 %v1958
        %v1998 = vunpack.c.l.b16 %v1959
        %v1999 = vunpack.c.l.b16 %v1960
        %v2000 = vunpack.c.l.b16 %v1961
        %v2001 = vunpack.c.l.b16 %v1962
        %v2002 = vunpack.c.l.b16 %v1963
        %v2003 = vunpack.c.l.b16 %v1964
        %v2004 = vunpack.c.l.b16 %v1965
        %v2005 = vunpack.c.l.b16 %v1966
        %v2006 = vunpack.c.l.b16 %v1967
        %v2007 = vunpack.c.l.b16 %v1968
        %v2008 = vunpack.c.l.b16 %v1969
        %v2009 = vunpack.c.l.b16 %v1970
        %v2010 = vunpack.c.l.b16 %v1971
        %v2011 = vpack.c.b16 %v1996, %v1995
        %v2012 = vpack.c.b16 %v1998, %v1997
        %v2013 = vpack.c.b16 %v2000, %v1999
        %v2014 = vpack.c.b16 %v2002, %v2001
        %v2015 = vpack.c.b16 %v2004, %v2003
        %v2016 = vpack.c.b16 %v2006, %v2005
        %v2017 = vpack.c.b16 %v2008, %v2007
        %v2018 = vpack.c.b16 %v2010, %v2009
        %2027 = vmatprep.subr.bf16.mxu0 0
        %2028 = vmatpush1.bf16.msra.mxu0 %v2011
        %2029 = vmatprep.subr.bf16.mxu0 0
        %2030 = vmatpush1.bf16.msra.mxu0 %v2012
        %2031 = vmatprep.subr.bf16.mxu0 0
        %2032 = vmatpush1.bf16.msra.mxu0 %v2013
        %2033 = vmatprep.subr.bf16.mxu0 0
        %2034 = vmatpush1.bf16.msra.mxu0 %v2014
        %2035 = vmatprep.subr.bf16.mxu0 0
        %2036 = vmatpush1.bf16.msra.mxu0 %v2015
        %2037 = vmatprep.subr.bf16.mxu0 0
        %2038 = vmatpush1.bf16.msra.mxu0 %v2016
        %2039 = vmatprep.subr.bf16.mxu0 0
        %2040 = vmatpush1.bf16.msra.mxu0 %v2017
        %2041 = vmatprep.subr.bf16.mxu0 0
        %2042 = vmatpush1.bf16.msra.mxu0 %v2018
        %2043 = vmatprep.subr.bf16.mxu0 0
        %2044 = vmatpush1.bf16.msra.mxu0 0
        %2045 = vmatprep.subr.bf16.mxu0 0
        %2046 = vmatpush1.bf16.msra.mxu0 0
        %2047 = vmatprep.subr.bf16.mxu0 0
        %2048 = vmatpush1.bf16.msra.mxu0 0
        %2049 = vmatprep.subr.bf16.mxu0 0
        %2050 = vmatpush1.bf16.msra.mxu0 0
        %2051 = vmatprep.subr.bf16.mxu0 0
        %2052 = vmatpush1.bf16.msra.mxu0 0
        %2053 = vmatprep.subr.bf16.mxu0 0
        %2054 = vmatpush1.bf16.msra.mxu0 0
        %2055 = vmatprep.subr.bf16.mxu0 0
        %2056 = vmatpush1.bf16.msra.mxu0 0
        %2057 = vmatprep.subr.bf16.mxu0 0
        %2058 = vmatpush1.bf16.msra.mxu0 0
        %2059 = vmatprep.mubr.bf16.mxu0 0
        %2060 = vmatmul.mubr.bf16.gmra.mrb[0].mxu0 %v1948
        %v2061 = vpop.f32.mrb[0].mxu0
        %v2062 = vadd.f32 %v1977, %v2061
        %v2063 = vpop.f32.mrb[0].mxu0
        %v2064 = vpop.f32.mrb[0].mxu0
        %v2065 = vadd.f32 %v1977, %v2064
        %v2066 = vpop.f32.mrb[0].mxu0
        %2067 = vmatprep.mubr.bf16.mxu0 0
        %2068 = vmatmul.mubr.bf16.gmra.mrb[0].mxu0 %v1949
        %v2069 = vpop.f32.mrb[0].mxu0
        %v2070 = vadd.f32 %v1977, %v2069
        %v2071 = vpop.f32.mrb[0].mxu0
        %v2072 = vpop.f32.mrb[0].mxu0
        %v2073 = vadd.f32 %v1977, %v2072
        %v2074 = vpop.f32.mrb[0].mxu0
        %2075 = vmatprep.mubr.bf16.mxu0 0
        %2076 = vmatmul.mubr.bf16.gmra.mrb[0].mxu0 %v1950
        %v2077 = vpop.f32.mrb[0].mxu0
        %v2078 = vadd.f32 %v1977, %v2077
        %v2079 = vpop.f32.mrb[0].mxu0
        %v2080 = vpop.f32.mrb[0].mxu0
        %v2081 = vadd.f32 %v1977, %v2080
        %v2082 = vpop.f32.mrb[0].mxu0
        %2083 = vmatprep.mubr.bf16.mxu0 0
        %2084 = vmatmul.mubr.bf16.gmra.mrb[0].mxu0 %v1951
        %v2085 = vpop.f32.mrb[0].mxu0
        %v2086 = vadd.f32 %v1977, %v2085
        %v2087 = vpop.f32.mrb[0].mxu0
        %v2088 = vpop.f32.mrb[0].mxu0
        %v2089 = vadd.f32 %v1977, %v2088
        %v2090 = vpop.f32.mrb[0].mxu0
        %2091 = vmatprep.mubr.bf16.mxu0 0
        %2092 = vmatmul.mubr.bf16.gmra.mrb[0].mxu0 %v1952
        %v2093 = vpop.f32.mrb[0].mxu0
        %v2094 = vadd.f32 %v1977, %v2093
        %v2095 = vpop.f32.mrb[0].mxu0
        %v2096 = vpop.f32.mrb[0].mxu0
        %v2097 = vadd.f32 %v1977, %v2096
        %v2098 = vpop.f32.mrb[0].mxu0
        %2099 = vmatprep.mubr.bf16.mxu0 0
        %2100 = vmatmul.mubr.bf16.gmra.mrb[0].mxu0 %v1953
        %v2101 = vpop.f32.mrb[0].mxu0
        %v2102 = vadd.f32 %v1977, %v2101
        %v2103 = vpop.f32.mrb[0].mxu0
        %v2104 = vpop.f32.mrb[0].mxu0
        %v2105 = vadd.f32 %v1977, %v2104
        %v2106 = vpop.f32.mrb[0].mxu0
        %2107 = vmatprep.mubr.bf16.mxu0 0
        %2108 = vmatmul.mubr.bf16.gmra.mrb[0].mxu0 %v1954
        %v2109 = vpop.f32.mrb[0].mxu0
        %v2110 = vadd.f32 %v1977, %v2109
        %v2111 = vpop.f32.mrb[0].mxu0
        %v2112 = vpop.f32.mrb[0].mxu0
        %v2113 = vadd.f32 %v1977, %v2112
        %v2114 = vpop.f32.mrb[0].mxu0
        %2115 = vmatprep.mubr.bf16.mxu0 0
        %2116 = vmatmul.mubr.bf16.gmra.mrb[0].mxu0 %v1955
        %v2117 = vpop.f32.mrb[0].mxu0
        %v2118 = vadd.f32 %v1977, %v2117
        %v2119 = vpop.f32.mrb[0].mxu0
        %v2120 = vpop.f32.mrb[0].mxu0
        %v2121 = vadd.f32 %v1977, %v2120
        %v2122 = vpop.f32.mrb[0].mxu0
        %2123 = vdwg.mxu0
        %v2124 = vmax.f32 %v2062, 0.0
        %v2125 = vmax.f32 %v2065, 0.0
        %v2126 = vmax.f32 %v2070, 0.0
        %v2127 = vmax.f32 %v2073, 0.0
        %v2128 = vmax.f32 %v2078, 0.0
        %v2129 = vmax.f32 %v2081, 0.0
        %v2130 = vmax.f32 %v2086, 0.0
        %v2131 = vmax.f32 %v2089, 0.0
        %v2132 = vmax.f32 %v2094, 0.0
        %v2133 = vmax.f32 %v2097, 0.0
        %v2134 = vmax.f32 %v2102, 0.0
        %v2135 = vmax.f32 %v2105, 0.0
        %v2136 = vmax.f32 %v2110, 0.0
        %v2137 = vmax.f32 %v2113, 0.0
        %v2138 = vmax.f32 %v2118, 0.0
        %v2139 = vmax.f32 %v2121, 0.0
        %v2140 = vld [vmem:[%s9] sm:$0x1]
        %v2142 = vlaneseq
        %v2143 = vshrl.u32 %v2142, 7
        %v2144 = vsub.s32 0, %v2143
        %v2145 = vrot.slane %v2140, %v2144
        %v2147 = vmul.f32 %v2124, %v2145
        %v2148 = vmul.f32 %v2125, %v2145
        %v2149 = vmul.f32 %v2126, %v2145
        %v2150 = vmul.f32 %v2127, %v2145
        %v2151 = vmul.f32 %v2128, %v2145
        %v2152 = vmul.f32 %v2129, %v2145
        %v2153 = vmul.f32 %v2130, %v2145
        %v2154 = vmul.f32 %v2131, %v2145
        %v2155 = vmul.f32 %v2132, %v2145
        %v2156 = vmul.f32 %v2133, %v2145
        %v2157 = vmul.f32 %v2134, %v2145
        %v2158 = vmul.f32 %v2135, %v2145
        %v2159 = vmul.f32 %v2136, %v2145
        %v2160 = vmul.f32 %v2137, %v2145
        %v2161 = vmul.f32 %v2138, %v2145
        %v2162 = vmul.f32 %v2139, %v2145
        %2163 = vadd.xlane.f32.xlu0 %v2147
        %v2164 = vpop.xlane.xlu0 %2163
        %2165 = vadd.xlane.f32.xlu0 %v2148
        %v2166 = vpop.xlane.xlu0 %2165
        %2167 = vadd.xlane.f32.xlu0 %v2149
        %v2168 = vpop.xlane.xlu0 %2167
        %2169 = vadd.xlane.f32.xlu0 %v2150
        %v2170 = vpop.xlane.xlu0 %2169
        %2171 = vadd.xlane.f32.xlu0 %v2151
        %v2172 = vpop.xlane.xlu0 %2171
        %2173 = vadd.xlane.f32.xlu0 %v2152
        %v2174 = vpop.xlane.xlu0 %2173
        %2175 = vadd.xlane.f32.xlu0 %v2153
        %v2176 = vpop.xlane.xlu0 %2175
        %2177 = vadd.xlane.f32.xlu0 %v2154
        %v2178 = vpop.xlane.xlu0 %2177
        %2179 = vadd.xlane.f32.xlu0 %v2155
        %v2180 = vpop.xlane.xlu0 %2179
        %2181 = vadd.xlane.f32.xlu0 %v2156
        %v2182 = vpop.xlane.xlu0 %2181
        %2183 = vadd.xlane.f32.xlu0 %v2157
        %v2184 = vpop.xlane.xlu0 %2183
        %2185 = vadd.xlane.f32.xlu0 %v2158
        %v2186 = vpop.xlane.xlu0 %2185
        %2187 = vadd.xlane.f32.xlu0 %v2159
        %v2188 = vpop.xlane.xlu0 %2187
        %2189 = vadd.xlane.f32.xlu0 %v2160
        %v2190 = vpop.xlane.xlu0 %2189
        %2191 = vadd.xlane.f32.xlu0 %v2161
        %v2192 = vpop.xlane.xlu0 %2191
        %2193 = vadd.xlane.f32.xlu0 %v2162
        %v2194 = vpop.xlane.xlu0 %2193
        %s2195 = sld [smem:[#allocation3]]
        %v2196 = vstv %s2195
        %v2197 = vadd.f32 %v2164, %v2196
        %v2198 = vadd.f32 %v2166, %v2196
        %v2199 = vadd.f32 %v2168, %v2196
        %v2200 = vadd.f32 %v2170, %v2196
        %v2201 = vadd.f32 %v2172, %v2196
        %v2202 = vadd.f32 %v2174, %v2196
        %v2203 = vadd.f32 %v2176, %v2196
        %v2204 = vadd.f32 %v2178, %v2196
        %v2205 = vadd.f32 %v2180, %v2196
        %v2206 = vadd.f32 %v2182, %v2196
        %v2207 = vadd.f32 %v2184, %v2196
        %v2208 = vadd.f32 %v2186, %v2196
        %v2209 = vadd.f32 %v2188, %v2196
        %v2210 = vadd.f32 %v2190, %v2196
        %v2211 = vadd.f32 %v2192, %v2196
        %v2212 = vadd.f32 %v2194, %v2196
        %vm2213 = vcmask 7168
        %2214 = vst.msk [vmem:[%s522] sm:$0xff] %vm2213, %v2197
        %2215 = vst.msk [vmem:[%s522 + $0x8] sm:$0xff] %vm2213, %v2198
        %2216 = vst.msk [vmem:[%s522 + $0x10] sm:$0xff] %vm2213, %v2199
        %2217 = vst.msk [vmem:[%s522 + $0x18] sm:$0xff] %vm2213, %v2200
        %2218 = vst.msk [vmem:[%s522 + $0x20] sm:$0xff] %vm2213, %v2201
        %2219 = vst.msk [vmem:[%s522 + $0x28] sm:$0xff] %vm2213, %v2202
        %2220 = vst.msk [vmem:[%s522 + $0x30] sm:$0xff] %vm2213, %v2203
        %2221 = vst.msk [vmem:[%s522 + $0x38] sm:$0xff] %vm2213, %v2204
        %2222 = vst.msk [vmem:[%s522 + $0x40] sm:$0xff] %vm2213, %v2205
        %2223 = vst.msk [vmem:[%s522 + $0x48] sm:$0xff] %vm2213, %v2206
        %2224 = vst.msk [vmem:[%s522 + $0x50] sm:$0xff] %vm2213, %v2207
        %2225 = vst.msk [vmem:[%s522 + $0x58] sm:$0xff] %vm2213, %v2208
        %2226 = vst.msk [vmem:[%s522 + $0x60] sm:$0xff] %vm2213, %v2209
        %2227 = vst.msk [vmem:[%s522 + $0x68] sm:$0xff] %vm2213, %v2210
        %2228 = vst.msk [vmem:[%s522 + $0x70] sm:$0xff] %vm2213, %v2211
        %2229 = vst.msk [vmem:[%s522 + $0x78] sm:$0xff] %vm2213, %v2212
        %s2230 = smul.u32 16, %s30
        %p2231 = scmp.lt.s32.totalorder %s2230, 31
        %s2232 = scalar_select %p2231, %s2230, 31
        %s2233 = smul.addr %s2232, 8
        %s2234 = scalar_lea.vmem %s11, %s2233
        // Predicated region
        $region81: #{tpu_custom_call.1} parent=63 // pred_check
          %p2235 = pneg %p299
        $region82: #{tpu_custom_call.1} parent=63 // pred_check_branch
          %2237 = sbr.rel (%p2235) target = $region84
        $region83: #{tpu_custom_call.1} parent=63 // pred_region
          %s2238 = smul.u32 16, %s30
        $region84: #{tpu_custom_call.1} parent=63 // pred_fallthru
          _
      $region64: #{tpu_custom_call.1} parent=5 // pred_fallthru
        _
      %p2239 = scmp.le.s32.totalorder 2, %s25
      // Predicated region
      $region85: #{tpu_custom_call.1} parent=5 // pred_check
        %p2240 = pneg %p2239
      $region86: #{tpu_custom_call.1} parent=5 // pred_check_branch
        %2242 = sbr.rel (%p2240) target = $region88
      $region87: #{tpu_custom_call.1} parent=5 // pred_region
        %s2243 = ssub.s32 %s25, 2
        // Predicated region
        $region89: #{tpu_custom_call.1} parent=87 // pred_check
          %p2244 = pneg %p305
        $region90: #{tpu_custom_call.1} parent=87 // pred_check_branch
          %2246 = sbr.rel (%p2244) target = $region92
        $region91: #{tpu_custom_call.1} parent=87 // pred_region
          %s2247 = smul.u32 16, %s31
          %p2248 = scmp.lt.s32.totalorder %s2247, 31
          %s2249 = scalar_select %p2248, %s2247, 31
          %s2250 = smul.addr %s2249, 8
          %s2251 = scalar_lea.vmem %s11, %s2250
        $region92: #{tpu_custom_call.1} parent=87 // pred_fallthru
          _
      $region88: #{tpu_custom_call.1} parent=5 // pred_fallthru
        _
    $region6: #{tpu_custom_call.1} parent=1 // loop_footer
      %s29 = sadd.s32 1, %s25
    $region7: #{tpu_custom_call.1} parent=1 // loop_footer_branch
      %24 = sbr.rel target = $region3
    $region8: #{tpu_custom_call.1} parent=1 // loop_exit
      _
    %2252 = vsyncpa [#allocation5], 1
    %s2253 = scalar_lea.sflag [#allocation5], 1
    %2254 = vsyncpa %s2253, 1
    %2255 = vsyncpa [#allocation7], 1
    %s2256 = scalar_lea.sflag [#allocation7], 1
    %2257 = vsyncpa %s2256, 1
    %2258 = vsyncpa [#allocation10], 1

</llo_original>
